<compile_context>
chip_gen: v7x
topology: tpu7x:2x2x1
jax: 0.10.0
libtpu: 0.0.40
codegen_flags: <defaults>
</compile_context>

<pallas_src>
import functools

import jax
import jax.numpy as jnp
from jax.experimental import pallas as pl
from jax.experimental.pallas import tpu as pltpu


# ----------------------------------------------------------------------------
# Kernel
# ----------------------------------------------------------------------------
def _trace_encoder_kernel(
    goal_ref, final_ref, steps_ref, stats_ref, pool_ref,
    w1s_ref, b1s_ref, w2s_ref, b2s_ref,          # step_encoder (H padded to Hp)
    w1t_ref, b1t_ref, w2t_ref, b2t_ref,          # stats_encoder (SI padded)
    wc1_ref, bc1_ref, wc2_ref, bc2_ref,          # combiner ([C,F] slab, [F,F])
    out_ref,
    *, inv_steps, e, hp,
):
    f32 = jnp.float32
    bf16 = jnp.bfloat16

    # ---- step encoder layer 1 on all (trace, step) rows: [TB*S, E] -> [TB*S, Hp]
    h1 = jnp.dot(steps_ref[...], w1s_ref[...], preferred_element_type=f32) + b1s_ref[...]
    h1 = jnp.maximum(h1, 0.0)

    # ---- mean-pool commuted ahead of the (affine) second step linear:
    # pool is a constant [TB, TB*S] block-diagonal ones matrix (bf16-exact);
    # the 1/S scale is applied as one f32 VPU multiply (exact for any S).
    pooled = jnp.dot(pool_ref[...], h1.astype(bf16), preferred_element_type=f32)
    pooled = pooled * inv_steps                                         # [TB, Hp]
    step_pooled = (jnp.dot(pooled.astype(bf16), w2s_ref[...],
                           preferred_element_type=f32) + b2s_ref[...])  # [TB, Hp]

    # ---- stats encoder: [TB, SIp] -> [TB, SH]
    s1 = jnp.dot(stats_ref[...], w1t_ref[...], preferred_element_type=f32) + b1t_ref[...]
    s1 = jnp.maximum(s1, 0.0)
    s2 = jnp.dot(s1.astype(bf16), w2t_ref[...], preferred_element_type=f32) + b2t_ref[...]

    # ---- combiner layer 1: four accumulated dots against static slices of the
    # wc1 slab (concat order goal|final|step|stats) -- no lane-concat VMEM copy.
    c0 = 2 * e + hp
    sh = wc1_ref.shape[0] - c0
    c1 = jnp.dot(goal_ref[...], wc1_ref[0:e, :], preferred_element_type=f32)
    c1 = c1 + jnp.dot(final_ref[...], wc1_ref[e:2 * e, :], preferred_element_type=f32)
    c1 = c1 + jnp.dot(step_pooled.astype(bf16), wc1_ref[2 * e:c0, :],
                      preferred_element_type=f32)
    c1 = c1 + jnp.dot(s2.astype(bf16), wc1_ref[c0:c0 + sh, :],
                      preferred_element_type=f32)
    c1 = jnp.maximum(c1 + bc1_ref[...], 0.0)

    # ---- combiner layer 2
    out_ref[...] = (jnp.dot(c1.astype(bf16), wc2_ref[...], preferred_element_type=f32)
                    + bc2_ref[...]).astype(out_ref.dtype)


# ----------------------------------------------------------------------------
# Wrapper
# ----------------------------------------------------------------------------
def _vmem_bytes_estimate(tb, s, e, hp, sip, sh, f):
    """Rough per-grid-step VMEM working set (bf16 operands, f32 intermediates)."""
    inputs = 2 * 2 * (tb * s * e + 2 * tb * e + tb * sip)               # dbl-buffered bf16
    weights = 2 * (e * hp + hp * hp + sip * sh + sh * sh
                   + (2 * e + hp + sh) * f + f * f) + 4 * (2 * hp + 2 * sh + 2 * f)
    pool = 2 * tb * (tb * s)
    interm = 4 * (tb * s * hp + 2 * tb * hp + 2 * tb * sh + 2 * tb * f)
    out = 2 * tb * f * 4
    return inputs + weights + pool + interm + out


def epistemic_trace_encode(goal, final, steps, stats_padded, packed,
                           *, num_steps, batch_tile=16):
    """Encodes B traces at once. Returns [B, final_dim] f32 (row b = trace b)."""
    B, E = goal.shape
    S = num_steps
    SIp = stats_padded.shape[-1]
    Hp = packed["w1s"].shape[-1]
    F = packed["wc2"].shape[-1]
    tb = batch_tile
    assert B % tb == 0, "batch must be a multiple of the batch tile"
    assert tb % 16 == 0, "batch tile must be a multiple of 16 (bf16 sublane packing)"

    bf16 = jnp.bfloat16
    # Flatten steps trace-major, step-minor; cast MXU operands to bf16 on host.
    steps_flat = steps.reshape(B * S, E).astype(bf16)
    goal_b = goal.astype(bf16)
    final_b = final.astype(bf16)
    stats_b = stats_padded.astype(bf16)
    # Block-diagonal ones pooling matrix (sum over steps); exact in bf16.
    pool = jnp.kron(jnp.eye(tb, dtype=jnp.float32),
                    jnp.ones((1, S), jnp.float32)).astype(bf16)          # [tb, tb*S]

    weight_keys = ("w1s", "b1s", "w2s", "b2s",
                   "w1t", "b1t", "w2t", "b2t",
                   "wc1", "bc1", "wc2", "bc2")

    in_specs = [
        pl.BlockSpec((tb, E), lambda b: (b, 0)),        # goal  (per-batch tile)
        pl.BlockSpec((tb, E), lambda b: (b, 0)),        # final
        pl.BlockSpec((tb * S, E), lambda b: (b, 0)),    # steps (flattened B*S)
        pl.BlockSpec((tb, SIp), lambda b: (b, 0)),      # stats
        pl.BlockSpec(pool.shape, lambda b: (0, 0)),     # pooling matrix (constant)
    ] + [
        # Weights: full block, constant index map -> DMA'd once, VMEM-resident.
        pl.BlockSpec(packed[k].shape, lambda b: (0, 0)) for k in weight_keys
    ]

    # Only raise the scoped VMEM limit if a large tile actually needs it
    # (matters on v7x: 64 MiB physical / 32 MiB scoped default).
    est = _vmem_bytes_estimate(tb, S, E, Hp, SIp,
                               packed["w2t"].shape[0], F)
    vmem_limit = None
    if est * 3 // 2 > 32 * 1024 * 1024:
        vmem_limit = min(est * 2, 48 * 1024 * 1024)

    out = pl.pallas_call(
        functools.partial(_trace_encoder_kernel,
                          inv_steps=1.0 / S, e=E, hp=Hp),
        out_shape=jax.ShapeDtypeStruct((B, F), jnp.float32),
        grid_spec=pltpu.PrefetchScalarGridSpec(
            num_scalar_prefetch=0,
            grid=(B // tb,),
            in_specs=in_specs,
            out_specs=pl.BlockSpec((tb, F), lambda b: (b, 0)),
        ),
        compiler_params=pltpu.CompilerParams(
            dimension_semantics=("parallel",),      # both TCs on v7x take half B
            vmem_limit_bytes=vmem_limit),
    )(goal_b, final_b, steps_flat, stats_b, pool,
      *(packed[k] for k in weight_keys))
    return out


# ----------------------------------------------------------------------------
# Host-side parameter packing (zero-pad H and SI to full lane width, bf16 weights)
# ----------------------------------------------------------------------------
def _pad2(a, rows, cols):
    out = jnp.zeros((rows, cols), jnp.float32)
    return out.at[: a.shape[0], : a.shape[1]].set(a)


def _pack_params(p, *, E, H, SI, SH, F, Hp, SIp):
    bf16 = jnp.bfloat16
    wc1 = p["wc1"]                                   # [2E + H + SH, F]
    wc1_step = _pad2(wc1[2 * E:2 * E + H], Hp, F)    # padded rows hit zero acts
    wc1_slab = jnp.concatenate(
        [wc1[:E], wc1[E:2 * E], wc1_step, wc1[2 * E + H:]], axis=0)
    return {
        # step_encoder, hidden dim padded H -> Hp with exact zeros
        "w1s": _pad2(p["w1s"], E, Hp).astype(bf16),
        "b1s": _pad2(p["b1s"], 1, Hp),                       # biases stay f32 (VPU)
        "w2s": _pad2(p["w2s"], Hp, Hp).astype(bf16),
        "b2s": _pad2(p["b2s"], 1, Hp),
        # stats_encoder, input dim padded SI -> SIp with exact zeros
        "w1t": _pad2(p["w1t"], SIp, SH).astype(bf16),
        "b1t": p["b1t"],
        "w2t": p["w2t"].astype(bf16),
        "b2t": p["b2t"],
        # combiner layer-1 as one slab (concat order: goal|final|step|stats)
        "wc1": wc1_slab.astype(bf16),
        "bc1": p["bc1"],
        "wc2": p["wc2"].astype(bf16),
        "bc2": p["bc2"],
    }


def _init_params(key, E, H, SI, SH, F):
    """Deterministic synthetic init; weights stored as [in, out] (nn.Linear W^T)."""
    ks = jax.random.split(key, 8)

    def w(k, shape, scale):
        return (jax.random.normal(k, shape, jnp.float32) * scale).astype(jnp.float32)

    C = 2 * E + H + SH
    return {
        "w1s": w(ks[0], (E, H), 1.0 / E ** 0.5),
        "b1s": jnp.zeros((1, H), jnp.float32),
        "w2s": w(ks[1], (H, H), 1.0 / H ** 0.5),
        "b2s": w(ks[2], (1, H), 0.01),
        "w1t": w(ks[3], (SI, SH), 1.0 / SI ** 0.5),
        "b1t": jnp.zeros((1, SH), jnp.float32),
        "w2t": w(ks[4], (SH, SH), 1.0 / SH ** 0.5),
        "b2t": w(ks[5], (1, SH), 0.01),
        "wc1": w(ks[6], (C, F), 1.0 / C ** 0.5),
        "bc1": jnp.zeros((1, F), jnp.float32),
        "wc2": w(ks[7], (F, F), 1.0 / F ** 0.5),
        "bc2": jnp.zeros((1, F), jnp.float32),
    }


# ----------------------------------------------------------------------------
# References
# ----------------------------------------------------------------------------
def _reference_f32(goal, final, steps, stats, p):
    """Pure f32 JAX reference mirroring the PyTorch forward exactly (batched)."""
    h = jnp.maximum(jnp.einsum("bse,eh->bsh", steps, p["w1s"]) + p["b1s"], 0.0)
    h2 = jnp.einsum("bsh,hk->bsk", h, p["w2s"]) + p["b2s"]
    step_pooled = jnp.mean(h2, axis=1)                                  # [B, H]
    s = jnp.maximum(stats @ p["w1t"] + p["b1t"], 0.0) @ p["w2t"] + p["b2t"]
    combined = jnp.concatenate([goal, final, step_pooled, s], axis=-1)
    return jnp.maximum(combined @ p["wc1"] + p["bc1"], 0.0) @ p["wc2"] + p["bc2"]


def _reference_bf16(goal, final, steps, stats_padded, packed, *, num_steps):
    """Mirrors the kernel's bf16-operand / f32-accumulate numerics in plain JAX."""
    bf16, f32 = jnp.bfloat16, jnp.float32
    B, E = goal.shape
    Hp = packed["w1s"].shape[-1]

    def mm(a, b):
        return jnp.dot(a.astype(bf16), b.astype(bf16), preferred_element_type=f32)

    steps_flat = steps.reshape(B * num_steps, E)
    h1 = jnp.maximum(mm(steps_flat, packed["w1s"]) + packed["b1s"], 0.0)
    pooled = (h1.astype(bf16).astype(f32).reshape(B, num_steps, Hp).sum(axis=1)
              * (1.0 / num_steps))
    step_pooled = mm(pooled, packed["w2s"]) + packed["b2s"]
    s1 = jnp.maximum(mm(stats_padded, packed["w1t"]) + packed["b1t"], 0.0)
    s2 = mm(s1, packed["w2t"]) + packed["b2t"]
    wc1 = packed["wc1"]
    c1 = (mm(goal, wc1[:E]) + mm(final, wc1[E:2 * E])
          + mm(step_pooled, wc1[2 * E:2 * E + Hp]) + mm(s2, wc1[2 * E + Hp:]))
    c1 = jnp.maximum(c1 + packed["bc1"], 0.0)
    return mm(c1, packed["wc2"]) + packed["bc2"]


# ----------------------------------------------------------------------------
if __name__ == "__main__":
    # Small TPU-friendly config (analogue of the module's cfg dict).
    E = 128    # embedding_dim
    H = 64     # step_hidden_dim   (module default; zero-padded to Hp=128 lanes)
    SI = 32    # stats_input_dim   (module default; zero-padded to SIp=128 lanes)
    SH = 128   # stats_hidden_dim
    F = 256    # final_dim
    S = 8      # execution steps per trace
    B = 32     # batch of traces
    Hp, SIp = 128, 128
    TB = 16    # batch tile: TB*S=128 fills MXU rows; grid=2 keeps v7x's 2 TCs busy

    key = jax.random.PRNGKey(0)
    k_in, k_p = jax.random.split(key)
    ki = jax.random.split(k_in, 4)

    goal = jax.random.normal(ki[0], (B, E), dtype=jnp.float32)
    final = jax.random.normal(ki[1], (B, E), dtype=jnp.float32)
    steps = jax.random.normal(ki[2], (B, S, E), dtype=jnp.float32)
    stats = jax.random.normal(ki[3], (B, SI), dtype=jnp.float32)

    params = _init_params(k_p, E, H, SI, SH, F)
    packed = _pack_params(params, E=E, H=H, SI=SI, SH=SH, F=F, Hp=Hp, SIp=SIp)
    stats_padded = _pad2(stats, B, SIp)

    z = epistemic_trace_encode(goal, final, steps, stats_padded, packed,
                               num_steps=S, batch_tile=TB)
    z = jax.block_until_ready(z)
    assert z.shape == (B, F)

    # Exact-structure check against a bf16-matched reference (same quantization).
    z_bf = _reference_bf16(goal, final, steps, stats_padded, packed, num_steps=S)
    assert jnp.allclose(z, z_bf, atol=1e-2, rtol=1e-2), "mismatch vs bf16 reference"

    # Loose check against the full-f32 PyTorch-equivalent math (bf16 MXU operands
    # introduce small quantization error).
    z_f32 = _reference_f32(goal, final, steps, stats, params)
    assert jnp.allclose(z, z_f32, atol=1.5e-1, rtol=1e-1), "mismatch vs f32 reference"

    print("KERNEL_OK")
</pallas_src>

<mosaic_0001>
module attributes {stable_mosaic.version = 11 : i64} {
  func.func @_trace_encoder_kernel(%arg0: i32, %arg1: memref<16x128xbf16, #tpu.memory_space<vmem>>, %arg2: memref<16x128xbf16, #tpu.memory_space<vmem>>, %arg3: memref<128x128xbf16, #tpu.memory_space<vmem>>, %arg4: memref<16x128xbf16, #tpu.memory_space<vmem>>, %arg5: memref<16x128xbf16, #tpu.memory_space<vmem>>, %arg6: memref<128x128xbf16, #tpu.memory_space<vmem>>, %arg7: memref<1x128xf32, #tpu.memory_space<vmem>>, %arg8: memref<128x128xbf16, #tpu.memory_space<vmem>>, %arg9: memref<1x128xf32, #tpu.memory_space<vmem>>, %arg10: memref<128x128xbf16, #tpu.memory_space<vmem>>, %arg11: memref<1x128xf32, #tpu.memory_space<vmem>>, %arg12: memref<128x128xbf16, #tpu.memory_space<vmem>>, %arg13: memref<1x128xf32, #tpu.memory_space<vmem>>, %arg14: memref<512x256xbf16, #tpu.memory_space<vmem>>, %arg15: memref<1x256xf32, #tpu.memory_space<vmem>>, %arg16: memref<256x256xbf16, #tpu.memory_space<vmem>>, %arg17: memref<1x256xf32, #tpu.memory_space<vmem>>, %arg18: memref<16x256xf32, #tpu.memory_space<vmem>>) attributes {dimension_semantics = [#tpu.dimension_semantics<parallel>], iteration_bounds = array<i64: 2>, scalar_prefetch = 0 : i64, scratch_operands = 0 : i64, tpu.core_type = #tpu.core_type<tc>, window_params = [{transform_indices = @transform_0, window_bounds = array<i64: 16, 128>}, {transform_indices = @transform_1, window_bounds = array<i64: 16, 128>}, {transform_indices = @transform_2, window_bounds = array<i64: 128, 128>}, {transform_indices = @transform_3, window_bounds = array<i64: 16, 128>}, {pipeline_mode = #tpu.pipeline_mode<synchronous>, transform_indices = @transform_4, window_bounds = array<i64: 16, 128>}, {pipeline_mode = #tpu.pipeline_mode<synchronous>, transform_indices = @transform_5, window_bounds = array<i64: 128, 128>}, {pipeline_mode = #tpu.pipeline_mode<synchronous>, transform_indices = @transform_6, window_bounds = array<i64: 1, 128>}, {pipeline_mode = #tpu.pipeline_mode<synchronous>, transform_indices = @transform_7, window_bounds = array<i64: 128, 128>}, {pipeline_mode = #tpu.pipeline_mode<synchronous>, transform_indices = @transform_8, window_bounds = array<i64: 1, 128>}, {pipeline_mode = #tpu.pipeline_mode<synchronous>, transform_indices = @transform_9, window_bounds = array<i64: 128, 128>}, {pipeline_mode = #tpu.pipeline_mode<synchronous>, transform_indices = @transform_10, window_bounds = array<i64: 1, 128>}, {pipeline_mode = #tpu.pipeline_mode<synchronous>, transform_indices = @transform_11, window_bounds = array<i64: 128, 128>}, {pipeline_mode = #tpu.pipeline_mode<synchronous>, transform_indices = @transform_12, window_bounds = array<i64: 1, 128>}, {pipeline_mode = #tpu.pipeline_mode<synchronous>, transform_indices = @transform_13, window_bounds = array<i64: 512, 256>}, {pipeline_mode = #tpu.pipeline_mode<synchronous>, transform_indices = @transform_14, window_bounds = array<i64: 1, 256>}, {pipeline_mode = #tpu.pipeline_mode<synchronous>, transform_indices = @transform_15, window_bounds = array<i64: 256, 256>}, {pipeline_mode = #tpu.pipeline_mode<synchronous>, transform_indices = @transform_16, window_bounds = array<i64: 1, 256>}, {transform_indices = @transform_17, window_bounds = array<i64: 16, 256>}]} {
    %c0 = arith.constant 0 : index
    %c0_0 = arith.constant 0 : index
    %0 = vector.load %arg3[%c0, %c0_0] : memref<128x128xbf16, #tpu.memory_space<vmem>>, vector<128x128xbf16>
    %c0_1 = arith.constant 0 : index
    %c0_2 = arith.constant 0 : index
    %1 = vector.load %arg6[%c0_1, %c0_2] : memref<128x128xbf16, #tpu.memory_space<vmem>>, vector<128x128xbf16>
    %cst = arith.constant dense<0.000000e+00> : vector<128x128xf32>
    %2 = tpu.matmul %0, %1, %cst {dimension_numbers = #tpu.dot_dimension_numbers<[1], [0], [0], [1], [0, 0, 1, 1], [], []>} : vector<128x128xbf16>, vector<128x128xbf16>, vector<128x128xf32> -> vector<128x128xf32>
    %c0_3 = arith.constant 0 : index
    %c0_4 = arith.constant 0 : index
    %3 = vector.load %arg7[%c0_3, %c0_4] : memref<1x128xf32, #tpu.memory_space<vmem>>, vector<1x128xf32>
    %4 = vector.broadcast %3 : vector<1x128xf32> to vector<128x128xf32>
    %5 = arith.addf %2, %4 : vector<128x128xf32>
    %cst_5 = arith.constant 0.000000e+00 : f32
    %6 = vector.broadcast %cst_5 : f32 to vector<128x128xf32>
    %7 = arith.maximumf %5, %6 : vector<128x128xf32>
    %c0_6 = arith.constant 0 : index
    %c0_7 = arith.constant 0 : index
    %8 = vector.load %arg5[%c0_6, %c0_7] : memref<16x128xbf16, #tpu.memory_space<vmem>>, vector<16x128xbf16>
    %9 = arith.truncf %7 : vector<128x128xf32> to vector<128x128xbf16>
    %cst_8 = arith.constant dense<0.000000e+00> : vector<16x128xf32>
    %10 = tpu.matmul %8, %9, %cst_8 {dimension_numbers = #tpu.dot_dimension_numbers<[1], [0], [0], [1], [0, 0, 1, 1], [], []>} : vector<16x128xbf16>, vector<128x128xbf16>, vector<16x128xf32> -> vector<16x128xf32>
    %cst_9 = arith.constant 1.250000e-01 : f32
    %11 = vector.broadcast %cst_9 : f32 to vector<16x128xf32>
    %12 = arith.mulf %10, %11 : vector<16x128xf32>
    %13 = arith.truncf %12 : vector<16x128xf32> to vector<16x128xbf16>
    %c0_10 = arith.constant 0 : index
    %c0_11 = arith.constant 0 : index
    %14 = vector.load %arg8[%c0_10, %c0_11] : memref<128x128xbf16, #tpu.memory_space<vmem>>, vector<128x128xbf16>
    %cst_12 = arith.constant dense<0.000000e+00> : vector<16x128xf32>
    %15 = tpu.matmul %13, %14, %cst_12 {dimension_numbers = #tpu.dot_dimension_numbers<[1], [0], [0], [1], [0, 0, 1, 1], [], []>} : vector<16x128xbf16>, vector<128x128xbf16>, vector<16x128xf32> -> vector<16x128xf32>
    %c0_13 = arith.constant 0 : index
    %c0_14 = arith.constant 0 : index
    %16 = vector.load %arg9[%c0_13, %c0_14] : memref<1x128xf32, #tpu.memory_space<vmem>>, vector<1x128xf32>
    %17 = vector.broadcast %16 : vector<1x128xf32> to vector<16x128xf32>
    %18 = arith.addf %15, %17 : vector<16x128xf32>
    %c0_15 = arith.constant 0 : index
    %c0_16 = arith.constant 0 : index
    %19 = vector.load %arg4[%c0_15, %c0_16] : memref<16x128xbf16, #tpu.memory_space<vmem>>, vector<16x128xbf16>
    %c0_17 = arith.constant 0 : index
    %c0_18 = arith.constant 0 : index
    %20 = vector.load %arg10[%c0_17, %c0_18] : memref<128x128xbf16, #tpu.memory_space<vmem>>, vector<128x128xbf16>
    %cst_19 = arith.constant dense<0.000000e+00> : vector<16x128xf32>
    %21 = tpu.matmul %19, %20, %cst_19 {dimension_numbers = #tpu.dot_dimension_numbers<[1], [0], [0], [1], [0, 0, 1, 1], [], []>} : vector<16x128xbf16>, vector<128x128xbf16>, vector<16x128xf32> -> vector<16x128xf32>
    %c0_20 = arith.constant 0 : index
    %c0_21 = arith.constant 0 : index
    %22 = vector.load %arg11[%c0_20, %c0_21] : memref<1x128xf32, #tpu.memory_space<vmem>>, vector<1x128xf32>
    %23 = vector.broadcast %22 : vector<1x128xf32> to vector<16x128xf32>
    %24 = arith.addf %21, %23 : vector<16x128xf32>
    %cst_22 = arith.constant 0.000000e+00 : f32
    %25 = vector.broadcast %cst_22 : f32 to vector<16x128xf32>
    %26 = arith.maximumf %24, %25 : vector<16x128xf32>
    %27 = arith.truncf %26 : vector<16x128xf32> to vector<16x128xbf16>
    %c0_23 = arith.constant 0 : index
    %c0_24 = arith.constant 0 : index
    %28 = vector.load %arg12[%c0_23, %c0_24] : memref<128x128xbf16, #tpu.memory_space<vmem>>, vector<128x128xbf16>
    %cst_25 = arith.constant dense<0.000000e+00> : vector<16x128xf32>
    %29 = tpu.matmul %27, %28, %cst_25 {dimension_numbers = #tpu.dot_dimension_numbers<[1], [0], [0], [1], [0, 0, 1, 1], [], []>} : vector<16x128xbf16>, vector<128x128xbf16>, vector<16x128xf32> -> vector<16x128xf32>
    %c0_26 = arith.constant 0 : index
    %c0_27 = arith.constant 0 : index
    %30 = vector.load %arg13[%c0_26, %c0_27] : memref<1x128xf32, #tpu.memory_space<vmem>>, vector<1x128xf32>
    %31 = vector.broadcast %30 : vector<1x128xf32> to vector<16x128xf32>
    %32 = arith.addf %29, %31 : vector<16x128xf32>
    %c0_28 = arith.constant 0 : index
    %c0_29 = arith.constant 0 : index
    %33 = vector.load %arg1[%c0_28, %c0_29] : memref<16x128xbf16, #tpu.memory_space<vmem>>, vector<16x128xbf16>
    %c0_30 = arith.constant 0 : index
    %c0_31 = arith.constant 0 : index
    %34 = vector.load %arg14[%c0_30, %c0_31] : memref<512x256xbf16, #tpu.memory_space<vmem>>, vector<128x256xbf16>
    %cst_32 = arith.constant dense<0.000000e+00> : vector<16x256xf32>
    %35 = tpu.matmul %33, %34, %cst_32 {dimension_numbers = #tpu.dot_dimension_numbers<[1], [0], [0], [1], [0, 0, 1, 1], [], []>} : vector<16x128xbf16>, vector<128x256xbf16>, vector<16x256xf32> -> vector<16x256xf32>
    %c0_33 = arith.constant 0 : index
    %c0_34 = arith.constant 0 : index
    %36 = vector.load %arg2[%c0_33, %c0_34] : memref<16x128xbf16, #tpu.memory_space<vmem>>, vector<16x128xbf16>
    %c128 = arith.constant 128 : index
    %c0_35 = arith.constant 0 : index
    %37 = vector.load %arg14[%c128, %c0_35] : memref<512x256xbf16, #tpu.memory_space<vmem>>, vector<128x256xbf16>
    %cst_36 = arith.constant dense<0.000000e+00> : vector<16x256xf32>
    %38 = tpu.matmul %36, %37, %cst_36 {dimension_numbers = #tpu.dot_dimension_numbers<[1], [0], [0], [1], [0, 0, 1, 1], [], []>} : vector<16x128xbf16>, vector<128x256xbf16>, vector<16x256xf32> -> vector<16x256xf32>
    %39 = arith.addf %35, %38 : vector<16x256xf32>
    %40 = arith.truncf %18 : vector<16x128xf32> to vector<16x128xbf16>
    %c256 = arith.constant 256 : index
    %c0_37 = arith.constant 0 : index
    %41 = vector.load %arg14[%c256, %c0_37] : memref<512x256xbf16, #tpu.memory_space<vmem>>, vector<128x256xbf16>
    %cst_38 = arith.constant dense<0.000000e+00> : vector<16x256xf32>
    %42 = tpu.matmul %40, %41, %cst_38 {dimension_numbers = #tpu.dot_dimension_numbers<[1], [0], [0], [1], [0, 0, 1, 1], [], []>} : vector<16x128xbf16>, vector<128x256xbf16>, vector<16x256xf32> -> vector<16x256xf32>
    %43 = arith.addf %39, %42 : vector<16x256xf32>
    %44 = arith.truncf %32 : vector<16x128xf32> to vector<16x128xbf16>
    %c384 = arith.constant 384 : index
    %c0_39 = arith.constant 0 : index
    %45 = vector.load %arg14[%c384, %c0_39] : memref<512x256xbf16, #tpu.memory_space<vmem>>, vector<128x256xbf16>
    %cst_40 = arith.constant dense<0.000000e+00> : vector<16x256xf32>
    %46 = tpu.matmul %44, %45, %cst_40 {dimension_numbers = #tpu.dot_dimension_numbers<[1], [0], [0], [1], [0, 0, 1, 1], [], []>} : vector<16x128xbf16>, vector<128x256xbf16>, vector<16x256xf32> -> vector<16x256xf32>
    %47 = arith.addf %43, %46 : vector<16x256xf32>
    %c0_41 = arith.constant 0 : index
    %c0_42 = arith.constant 0 : index
    %48 = vector.load %arg15[%c0_41, %c0_42] : memref<1x256xf32, #tpu.memory_space<vmem>>, vector<1x256xf32>
    %49 = vector.broadcast %48 : vector<1x256xf32> to vector<16x256xf32>
    %50 = arith.addf %47, %49 : vector<16x256xf32>
    %cst_43 = arith.constant 0.000000e+00 : f32
    %51 = vector.broadcast %cst_43 : f32 to vector<16x256xf32>
    %52 = arith.maximumf %50, %51 : vector<16x256xf32>
    %53 = arith.truncf %52 : vector<16x256xf32> to vector<16x256xbf16>
    %c0_44 = arith.constant 0 : index
    %c0_45 = arith.constant 0 : index
    %54 = vector.load %arg16[%c0_44, %c0_45] : memref<256x256xbf16, #tpu.memory_space<vmem>>, vector<256x256xbf16>
    %cst_46 = arith.constant dense<0.000000e+00> : vector<16x256xf32>
    %55 = tpu.matmul %53, %54, %cst_46 {dimension_numbers = #tpu.dot_dimension_numbers<[1], [0], [0], [1], [0, 0, 1, 1], [], []>} : vector<16x256xbf16>, vector<256x256xbf16>, vector<16x256xf32> -> vector<16x256xf32>
    %c0_47 = arith.constant 0 : index
    %c0_48 = arith.constant 0 : index
    %56 = vector.load %arg17[%c0_47, %c0_48] : memref<1x256xf32, #tpu.memory_space<vmem>>, vector<1x256xf32>
    %57 = vector.broadcast %56 : vector<1x256xf32> to vector<16x256xf32>
    %58 = arith.addf %55, %57 : vector<16x256xf32>
    %c0_49 = arith.constant 0 : index
    %c0_50 = arith.constant 0 : index
    %59 = vector.load %arg18[%c0_49, %c0_50] : memref<16x256xf32, #tpu.memory_space<vmem>>, vector<16x256xf32>
    tpu.vector_store %arg18[%c0_49, %c0_50], %58 {strides = array<i32>} : memref<16x256xf32, #tpu.memory_space<vmem>>, vector<16x256xf32>,
    return
  }
  func.func @transform_0(%arg0: i32) -> (i32, i32) {
    %c0_i32 = arith.constant 0 : i32
    %c0_i32_0 = arith.constant 0 : i32
    return %arg0, %c0_i32 : i32, i32
  }
  func.func @transform_1(%arg0: i32) -> (i32, i32) {
    %c0_i32 = arith.constant 0 : i32
    %c0_i32_0 = arith.constant 0 : i32
    return %arg0, %c0_i32 : i32, i32
  }
  func.func @transform_2(%arg0: i32) -> (i32, i32) {
    %c0_i32 = arith.constant 0 : i32
    %c0_i32_0 = arith.constant 0 : i32
    return %arg0, %c0_i32 : i32, i32
  }
  func.func @transform_3(%arg0: i32) -> (i32, i32) {
    %c0_i32 = arith.constant 0 : i32
    %c0_i32_0 = arith.constant 0 : i32
    return %arg0, %c0_i32 : i32, i32
  }
  func.func @transform_4(%arg0: i32) -> (i32, i32) {
    %c0_i32 = arith.constant 0 : i32
    %c0_i32_0 = arith.constant 0 : i32
    %c0_i32_1 = arith.constant 0 : i32
    return %c0_i32, %c0_i32_0 : i32, i32
  }
  func.func @transform_5(%arg0: i32) -> (i32, i32) {
    %c0_i32 = arith.constant 0 : i32
    %c0_i32_0 = arith.constant 0 : i32
    %c0_i32_1 = arith.constant 0 : i32
    return %c0_i32, %c0_i32_0 : i32, i32
  }
  func.func @transform_6(%arg0: i32) -> (i32, i32) {
    %c0_i32 = arith.constant 0 : i32
    %c0_i32_0 = arith.constant 0 : i32
    %c0_i32_1 = arith.constant 0 : i32
    return %c0_i32, %c0_i32_0 : i32, i32
  }
  func.func @transform_7(%arg0: i32) -> (i32, i32) {
    %c0_i32 = arith.constant 0 : i32
    %c0_i32_0 = arith.constant 0 : i32
    %c0_i32_1 = arith.constant 0 : i32
    return %c0_i32, %c0_i32_0 : i32, i32
  }
  func.func @transform_8(%arg0: i32) -> (i32, i32) {
    %c0_i32 = arith.constant 0 : i32
    %c0_i32_0 = arith.constant 0 : i32
    %c0_i32_1 = arith.constant 0 : i32
    return %c0_i32, %c0_i32_0 : i32, i32
  }
  func.func @transform_9(%arg0: i32) -> (i32, i32) {
    %c0_i32 = arith.constant 0 : i32
    %c0_i32_0 = arith.constant 0 : i32
    %c0_i32_1 = arith.constant 0 : i32
    return %c0_i32, %c0_i32_0 : i32, i32
  }
  func.func @transform_10(%arg0: i32) -> (i32, i32) {
    %c0_i32 = arith.constant 0 : i32
    %c0_i32_0 = arith.constant 0 : i32
    %c0_i32_1 = arith.constant 0 : i32
    return %c0_i32, %c0_i32_0 : i32, i32
  }
  func.func @transform_11(%arg0: i32) -> (i32, i32) {
    %c0_i32 = arith.constant 0 : i32
    %c0_i32_0 = arith.constant 0 : i32
    %c0_i32_1 = arith.constant 0 : i32
    return %c0_i32, %c0_i32_0 : i32, i32
  }
  func.func @transform_12(%arg0: i32) -> (i32, i32) {
    %c0_i32 = arith.constant 0 : i32
    %c0_i32_0 = arith.constant 0 : i32
    %c0_i32_1 = arith.constant 0 : i32
    return %c0_i32, %c0_i32_0 : i32, i32
  }
  func.func @transform_13(%arg0: i32) -> (i32, i32) {
    %c0_i32 = arith.constant 0 : i32
    %c0_i32_0 = arith.constant 0 : i32
    %c0_i32_1 = arith.constant 0 : i32
    return %c0_i32, %c0_i32_0 : i32, i32
  }
  func.func @transform_14(%arg0: i32) -> (i32, i32) {
    %c0_i32 = arith.constant 0 : i32
    %c0_i32_0 = arith.constant 0 : i32
    %c0_i32_1 = arith.constant 0 : i32
    return %c0_i32, %c0_i32_0 : i32, i32
  }
  func.func @transform_15(%arg0: i32) -> (i32, i32) {
    %c0_i32 = arith.constant 0 : i32
    %c0_i32_0 = arith.constant 0 : i32
    %c0_i32_1 = arith.constant 0 : i32
    return %c0_i32, %c0_i32_0 : i32, i32
  }
  func.func @transform_16(%arg0: i32) -> (i32, i32) {
    %c0_i32 = arith.constant 0 : i32
    %c0_i32_0 = arith.constant 0 : i32
    %c0_i32_1 = arith.constant 0 : i32
    return %c0_i32, %c0_i32_0 : i32, i32
  }
  func.func @transform_17(%arg0: i32) -> (i32, i32) {
    %c0_i32 = arith.constant 0 : i32
    %c0_i32_0 = arith.constant 0 : i32
    return %arg0, %c0_i32 : i32, i32
  }
}

</mosaic_0001>

<llo_original>
// kernel: tpu_custom_call.1
$region0: #{tpu_custom_call.1}
  #allocation0 [shape = 'u32[]', space=smem, size = 0x4, offset = 0x4, fixed_abs, tag = 'smem constant byte address 0x4 - core index']
  #allocation1 [shape = 'u32[144,128]{1,0:T(1,128)}', space=vmem, size = 0x12000, scoped, tag = 'internal scratch']
  %s0 = inlined_call_operand.hbm [shape: bf16[32,128], index: 0, kind: input, shape index: {}]
  %s1 = inlined_call_operand.hbm [shape: bf16[32,128], index: 1, kind: input, shape index: {}]
  %s2 = inlined_call_operand.hbm [shape: bf16[256,128], index: 2, kind: input, shape index: {}]
  %s3 = inlined_call_operand.hbm [shape: bf16[32,128], index: 3, kind: input, shape index: {}]
  %s4 = inlined_call_operand.vmem [shape: bf16[16,128], index: 4, kind: input, shape index: {}]
  %s5 = inlined_call_operand.hbm [shape: bf16[128,128], index: 5, kind: input, shape index: {}]
  %s6 = inlined_call_operand.vmem [shape: f32[1,128], index: 6, kind: input, shape index: {}]
  %s7 = inlined_call_operand.hbm [shape: bf16[128,128], index: 7, kind: input, shape index: {}]
  %s8 = inlined_call_operand.vmem [shape: f32[1,128], index: 8, kind: input, shape index: {}]
  %s9 = inlined_call_operand.hbm [shape: bf16[128,128], index: 9, kind: input, shape index: {}]
  %s10 = inlined_call_operand.vmem [shape: f32[1,128], index: 10, kind: input, shape index: {}]
  %s11 = inlined_call_operand.hbm [shape: bf16[128,128], index: 11, kind: input, shape index: {}]
  %s12 = inlined_call_operand.vmem [shape: f32[1,128], index: 12, kind: input, shape index: {}]
  %s13 = inlined_call_operand.hbm [shape: bf16[512,256], index: 13, kind: input, shape index: {}]
  %s14 = inlined_call_operand.vmem [shape: f32[1,256], index: 14, kind: input, shape index: {}]
  %s15 = inlined_call_operand.hbm [shape: bf16[256,256], index: 15, kind: input, shape index: {}]
  %s16 = inlined_call_operand.vmem [shape: f32[1,256], index: 16, kind: input, shape index: {}]
  %s17 = inlined_call_operand.hbm [shape: f32[32,256], index: 17, kind: output, shape index: {}]
  %s18 = sld [smem:[#allocation0]]
  $region141: #{tpu_custom_call.1} parent=0
    _
  %s20 = ssub.s32 1, %s18
  %s21 = scalar_select 0, %s20, %s18
  $region1: #{tpu_custom_call.1} parent=0
    #allocation2 [shape = 'u8[8192]{0}', space=vmem, size = 0x2000, scoped, tag = 'input window, operand 0']
    #allocation3 [shape = 's32[2]{0}', space=sflag, size = 0x8, scoped, tag = 'scoped memory for tpu_custom_call.1']
    #allocation4 [shape = 's32[2]{0}', space=sflag, size = 0x8, scoped, tag = 'scoped memory for tpu_custom_call.1']
    #allocation5 [shape = 'u8[8192]{0}', space=vmem, size = 0x2000, scoped, tag = 'input window, operand 1']
    #allocation6 [shape = 's32[2]{0}', space=sflag, size = 0x8, scoped, tag = 'scoped memory for tpu_custom_call.1']
    #allocation7 [shape = 'u8[65536]{0}', space=vmem, size = 0x10000, scoped, tag = 'input window, operand 2']
    #allocation8 [shape = 'u8[8192]{0}', space=vmem, size = 0x2000, scoped, tag = 'input window, operand 3']
    #allocation9 [shape = 's32[2]{0}', space=sflag, size = 0x8, scoped, tag = 'scoped memory for tpu_custom_call.1']
    #allocation10 [shape = 'u8[32768]{0}', space=vmem, size = 0x8000, scoped, tag = 'input window, operand 5, single buffered']
    #allocation11 [shape = 'u8[32768]{0}', space=vmem, size = 0x8000, scoped, tag = 'input window, operand 7, single buffered']
    #allocation12 [shape = 's32[1]{0}', space=sflag, size = 0x4, scoped, tag = 'scoped memory for tpu_custom_call.1']
    #allocation13 [shape = 'u8[32768]{0}', space=vmem, size = 0x8000, scoped, tag = 'input window, operand 9, single buffered']
    #allocation14 [shape = 'u8[32768]{0}', space=vmem, size = 0x8000, scoped, tag = 'input window, operand 11, single buffered']
    #allocation15 [shape = 's32[1]{0}', space=sflag, size = 0x4, scoped, tag = 'scoped memory for tpu_custom_call.1']
    #allocation16 [shape = 'u8[262144]{0}', space=vmem, size = 0x40000, scoped, tag = 'input window, operand 13, single buffered']
    #allocation17 [shape = 'u8[131072]{0}', space=vmem, size = 0x20000, scoped, tag = 'input window, operand 15, single buffered']
    #allocation18 [shape = 's32[1]{0}', space=sflag, size = 0x4, scoped, tag = 'scoped memory for tpu_custom_call.1']
    #allocation19 [shape = 'u8[32768]{0}', space=vmem, size = 0x8000, scoped, tag = 'output window, operand 0']
    %22 = vsyncpa [#allocation3], 0
    %s23 = scalar_lea.sflag [#allocation3], 1
    %24 = vsyncpa %s23, 0
    %25 = vsyncpa [#allocation6], 0
    %s26 = scalar_lea.sflag [#allocation6], 1
    %27 = vsyncpa %s26, 0
    %28 = vsyncpa [#allocation9], 0
    %s29 = scalar_lea.sflag [#allocation9], 1
    %30 = vsyncpa %s29, 0
    %31 = vsyncpa [#allocation12], 0
    %32 = vsyncpa [#allocation15], 0
    %33 = vsyncpa [#allocation18], 0
    %34 = vsyncpa [#allocation4], 0
    %s35 = scalar_lea.sflag [#allocation4], 1
    %36 = vsyncpa %s35, 0
    loop: start=0, step=1, limit=4
    $region2: #{tpu_custom_call.1} parent=1 // loop_pre_header
      _
    $region3: #{tpu_custom_call.1} parent=1 // loop_header
      %s38 = sphi 0, %s42
      %p39 = scmp.ge.s32.totalorder %s38, 4
      %s48 = sphi 0, %s50
      %s51 = sphi 0, %s48
      %s52 = sphi 0, %s51
      %s68 = sphi 0, %s52
      %s74 = sphi 0, %s76
      %s77 = sphi 0, %s74
      %s78 = sphi 0, %s77
      %s94 = sphi 0, %s78
      %s100 = sphi 0, %s102
      %s103 = sphi 0, %s100
      %s104 = sphi 0, %s103
      %s120 = sphi 0, %s104
      %s126 = sphi 0, %s128
      %s129 = sphi 0, %s126
      %s130 = sphi 0, %s129
      %s146 = sphi 0, %s130
      %s150 = sphi 0, %s150
      %s152 = sphi 0, %s150
      %s153 = sphi 0, %s152
      %s167 = sphi 0, %s153
      %s171 = sphi 0, %s171
      %s173 = sphi 0, %s171
      %s174 = sphi 0, %s173
      %s188 = sphi 0, %s174
      %s192 = sphi 0, %s192
      %s194 = sphi 0, %s192
      %s195 = sphi 0, %s194
      %s209 = sphi 0, %s195
      %s213 = sphi 0, %s213
      %s215 = sphi 0, %s213
      %s216 = sphi 0, %s215
      %s230 = sphi 0, %s216
      %s234 = sphi 0, %s234
      %s236 = sphi 0, %s234
      %s237 = sphi 0, %s236
      %s251 = sphi 0, %s237
      %s255 = sphi 0, %s255
      %s257 = sphi 0, %s255
      %s258 = sphi 0, %s257
      %s272 = sphi 0, %s258
      %s276 = sphi 0, %s276
      %s278 = sphi 0, %s276
      %s279 = sphi 0, %s278
      %s293 = sphi 0, %s279
      %s297 = sphi 0, %s297
      %s299 = sphi 0, %s297
      %s300 = sphi 0, %s299
      %s314 = sphi 0, %s300
      %s318 = sphi 0, %s318
      %s320 = sphi 0, %s318
      %s321 = sphi 0, %s320
      %s335 = sphi 0, %s321
      %s339 = sphi 0, %s339
      %s341 = sphi 0, %s339
      %s342 = sphi 0, %s341
      %s356 = sphi 0, %s342
      %s360 = sphi 0, %s360
      %s362 = sphi 0, %s360
      %s363 = sphi 0, %s362
      %s377 = sphi 0, %s363
      %s381 = sphi 0, %s381
      %s383 = sphi 0, %s381
      %s384 = sphi 0, %s383
      %s398 = sphi 0, %s384
      %s402 = sphi 0, %s402
      %s404 = sphi 0, %s402
      %s405 = sphi 0, %s404
      %s419 = sphi 0, %s405
      %s425 = sphi 0, %s427
      %s428 = sphi 0, %s425
      %s429 = sphi 0, %s428
      %s445 = sphi 0, %s429
    $region4: #{tpu_custom_call.1} parent=1 // loop_header_branch
      %41 = sbr.rel (%p39) target = $region8
    $region5: #{tpu_custom_call.1} parent=1 // loop_body
      %s43 = ssub.s32 %s38, 1
      %s44 = ssub.s32 %s38, 2
      %s45 = sadd.s32 %s38, 1
      %s46 = ssub.s32 %s38, %s45
      %p47 = scmp.eq.s32.totalorder %s46, 0
      %s49 = sadd.s32 %s48, 1
      %s50 = scalar_select %p47, %s48, %s49
      %p53 = pneg %p47
      %p54 = scmp.eq.s32.totalorder %s38, 1
      %p55 = por %p53, %p54
      %p56 = scmp.ne.s32.totalorder %s48, %s51
      %p57 = scmp.eq.s32.totalorder %s38, 0
      %p58 = por %p56, %p57
      %p59 = scmp.ne.s32.totalorder %s48, %s51
      %p60 = scmp.eq.s32.totalorder %s43, 1
      %p61 = por %p59, %p60
      %p62 = scmp.ne.s32.totalorder %s51, %s52
      %p63 = scmp.eq.s32.totalorder %s43, 0
      %p64 = por %p62, %p63
      %p65 = scmp.ne.s32.totalorder %s51, %s52
      %p66 = scmp.eq.s32.totalorder %s44, 1
      %p67 = por %p65, %p66
      %p69 = scmp.ne.s32.totalorder %s52, %s68
      %p70 = scmp.eq.s32.totalorder %s44, 0
      %p71 = por %p69, %p70
      %s72 = ssub.s32 %s38, %s45
      %p73 = scmp.eq.s32.totalorder %s72, 0
      %s75 = sadd.s32 %s74, 1
      %s76 = scalar_select %p73, %s74, %s75
      %p79 = pneg %p73
      %p80 = scmp.eq.s32.totalorder %s38, 1
      %p81 = por %p79, %p80
      %p82 = scmp.ne.s32.totalorder %s74, %s77
      %p83 = scmp.eq.s32.totalorder %s38, 0
      %p84 = por %p82, %p83
      %p85 = scmp.ne.s32.totalorder %s74, %s77
      %p86 = scmp.eq.s32.totalorder %s43, 1
      %p87 = por %p85, %p86
      %p88 = scmp.ne.s32.totalorder %s77, %s78
      %p89 = scmp.eq.s32.totalorder %s43, 0
      %p90 = por %p88, %p89
      %p91 = scmp.ne.s32.totalorder %s77, %s78
      %p92 = scmp.eq.s32.totalorder %s44, 1
      %p93 = por %p91, %p92
      %p95 = scmp.ne.s32.totalorder %s78, %s94
      %p96 = scmp.eq.s32.totalorder %s44, 0
      %p97 = por %p95, %p96
      %s98 = ssub.s32 %s38, %s45
      %p99 = scmp.eq.s32.totalorder %s98, 0
      %s101 = sadd.s32 %s100, 1
      %s102 = scalar_select %p99, %s100, %s101
      %p105 = pneg %p99
      %p106 = scmp.eq.s32.totalorder %s38, 1
      %p107 = por %p105, %p106
      %p108 = scmp.ne.s32.totalorder %s100, %s103
      %p109 = scmp.eq.s32.totalorder %s38, 0
      %p110 = por %p108, %p109
      %p111 = scmp.ne.s32.totalorder %s100, %s103
      %p112 = scmp.eq.s32.totalorder %s43, 1
      %p113 = por %p111, %p112
      %p114 = scmp.ne.s32.totalorder %s103, %s104
      %p115 = scmp.eq.s32.totalorder %s43, 0
      %p116 = por %p114, %p115
      %p117 = scmp.ne.s32.totalorder %s103, %s104
      %p118 = scmp.eq.s32.totalorder %s44, 1
      %p119 = por %p117, %p118
      %p121 = scmp.ne.s32.totalorder %s104, %s120
      %p122 = scmp.eq.s32.totalorder %s44, 0
      %p123 = por %p121, %p122
      %s124 = ssub.s32 %s38, %s45
      %p125 = scmp.eq.s32.totalorder %s124, 0
      %s127 = sadd.s32 %s126, 1
      %s128 = scalar_select %p125, %s126, %s127
      %p131 = pneg %p125
      %p132 = scmp.eq.s32.totalorder %s38, 1
      %p133 = por %p131, %p132
      %p134 = scmp.ne.s32.totalorder %s126, %s129
      %p135 = scmp.eq.s32.totalorder %s38, 0
      %p136 = por %p134, %p135
      %p137 = scmp.ne.s32.totalorder %s126, %s129
      %p138 = scmp.eq.s32.totalorder %s43, 1
      %p139 = por %p137, %p138
      %p140 = scmp.ne.s32.totalorder %s129, %s130
      %p141 = scmp.eq.s32.totalorder %s43, 0
      %p142 = por %p140, %p141
      %p143 = scmp.ne.s32.totalorder %s129, %s130
      %p144 = scmp.eq.s32.totalorder %s44, 1
      %p145 = por %p143, %p144
      %p147 = scmp.ne.s32.totalorder %s130, %s146
      %p148 = scmp.eq.s32.totalorder %s44, 0
      %p149 = por %p147, %p148
      %s151 = sadd.s32 %s150, 1
      %p154 = scmp.eq.s32.totalorder %s38, 1
      %p155 = scmp.ne.s32.totalorder %s150, %s152
      %p156 = scmp.eq.s32.totalorder %s38, 0
      %p157 = por %p155, %p156
      %p158 = scmp.ne.s32.totalorder %s150, %s152
      %p159 = scmp.eq.s32.totalorder %s43, 1
      %p160 = por %p158, %p159
      %p161 = scmp.ne.s32.totalorder %s152, %s153
      %p162 = scmp.eq.s32.totalorder %s43, 0
      %p163 = por %p161, %p162
      %p164 = scmp.ne.s32.totalorder %s152, %s153
      %p165 = scmp.eq.s32.totalorder %s44, 1
      %p166 = por %p164, %p165
      %p168 = scmp.ne.s32.totalorder %s153, %s167
      %p169 = scmp.eq.s32.totalorder %s44, 0
      %p170 = por %p168, %p169
      %s172 = sadd.s32 %s171, 1
      %p175 = scmp.eq.s32.totalorder %s38, 1
      %p176 = scmp.ne.s32.totalorder %s171, %s173
      %p177 = scmp.eq.s32.totalorder %s38, 0
      %p178 = por %p176, %p177
      %p179 = scmp.ne.s32.totalorder %s171, %s173
      %p180 = scmp.eq.s32.totalorder %s43, 1
      %p181 = por %p179, %p180
      %p182 = scmp.ne.s32.totalorder %s173, %s174
      %p183 = scmp.eq.s32.totalorder %s43, 0
      %p184 = por %p182, %p183
      %p185 = scmp.ne.s32.totalorder %s173, %s174
      %p186 = scmp.eq.s32.totalorder %s44, 1
      %p187 = por %p185, %p186
      %p189 = scmp.ne.s32.totalorder %s174, %s188
      %p190 = scmp.eq.s32.totalorder %s44, 0
      %p191 = por %p189, %p190
      %s193 = sadd.s32 %s192, 1
      %p196 = scmp.eq.s32.totalorder %s38, 1
      %p197 = scmp.ne.s32.totalorder %s192, %s194
      %p198 = scmp.eq.s32.totalorder %s38, 0
      %p199 = por %p197, %p198
      %p200 = scmp.ne.s32.totalorder %s192, %s194
      %p201 = scmp.eq.s32.totalorder %s43, 1
      %p202 = por %p200, %p201
      %p203 = scmp.ne.s32.totalorder %s194, %s195
      %p204 = scmp.eq.s32.totalorder %s43, 0
      %p205 = por %p203, %p204
      %p206 = scmp.ne.s32.totalorder %s194, %s195
      %p207 = scmp.eq.s32.totalorder %s44, 1
      %p208 = por %p206, %p207
      %p210 = scmp.ne.s32.totalorder %s195, %s209
      %p211 = scmp.eq.s32.totalorder %s44, 0
      %p212 = por %p210, %p211
      %s214 = sadd.s32 %s213, 1
      %p217 = scmp.eq.s32.totalorder %s38, 1
      %p218 = scmp.ne.s32.totalorder %s213, %s215
      %p219 = scmp.eq.s32.totalorder %s38, 0
      %p220 = por %p218, %p219
      %p221 = scmp.ne.s32.totalorder %s213, %s215
      %p222 = scmp.eq.s32.totalorder %s43, 1
      %p223 = por %p221, %p222
      %p224 = scmp.ne.s32.totalorder %s215, %s216
      %p225 = scmp.eq.s32.totalorder %s43, 0
      %p226 = por %p224, %p225
      %p227 = scmp.ne.s32.totalorder %s215, %s216
      %p228 = scmp.eq.s32.totalorder %s44, 1
      %p229 = por %p227, %p228
      %p231 = scmp.ne.s32.totalorder %s216, %s230
      %p232 = scmp.eq.s32.totalorder %s44, 0
      %p233 = por %p231, %p232
      %s235 = sadd.s32 %s234, 1
      %p238 = scmp.eq.s32.totalorder %s38, 1
      %p239 = scmp.ne.s32.totalorder %s234, %s236
      %p240 = scmp.eq.s32.totalorder %s38, 0
      %p241 = por %p239, %p240
      %p242 = scmp.ne.s32.totalorder %s234, %s236
      %p243 = scmp.eq.s32.totalorder %s43, 1
      %p244 = por %p242, %p243
      %p245 = scmp.ne.s32.totalorder %s236, %s237
      %p246 = scmp.eq.s32.totalorder %s43, 0
      %p247 = por %p245, %p246
      %p248 = scmp.ne.s32.totalorder %s236, %s237
      %p249 = scmp.eq.s32.totalorder %s44, 1
      %p250 = por %p248, %p249
      %p252 = scmp.ne.s32.totalorder %s237, %s251
      %p253 = scmp.eq.s32.totalorder %s44, 0
      %p254 = por %p252, %p253
      %s256 = sadd.s32 %s255, 1
      %p259 = scmp.eq.s32.totalorder %s38, 1
      %p260 = scmp.ne.s32.totalorder %s255, %s257
      %p261 = scmp.eq.s32.totalorder %s38, 0
      %p262 = por %p260, %p261
      %p263 = scmp.ne.s32.totalorder %s255, %s257
      %p264 = scmp.eq.s32.totalorder %s43, 1
      %p265 = por %p263, %p264
      %p266 = scmp.ne.s32.totalorder %s257, %s258
      %p267 = scmp.eq.s32.totalorder %s43, 0
      %p268 = por %p266, %p267
      %p269 = scmp.ne.s32.totalorder %s257, %s258
      %p270 = scmp.eq.s32.totalorder %s44, 1
      %p271 = por %p269, %p270
      %p273 = scmp.ne.s32.totalorder %s258, %s272
      %p274 = scmp.eq.s32.totalorder %s44, 0
      %p275 = por %p273, %p274
      %s277 = sadd.s32 %s276, 1
      %p280 = scmp.eq.s32.totalorder %s38, 1
      %p281 = scmp.ne.s32.totalorder %s276, %s278
      %p282 = scmp.eq.s32.totalorder %s38, 0
      %p283 = por %p281, %p282
      %p284 = scmp.ne.s32.totalorder %s276, %s278
      %p285 = scmp.eq.s32.totalorder %s43, 1
      %p286 = por %p284, %p285
      %p287 = scmp.ne.s32.totalorder %s278, %s279
      %p288 = scmp.eq.s32.totalorder %s43, 0
      %p289 = por %p287, %p288
      %p290 = scmp.ne.s32.totalorder %s278, %s279
      %p291 = scmp.eq.s32.totalorder %s44, 1
      %p292 = por %p290, %p291
      %p294 = scmp.ne.s32.totalorder %s279, %s293
      %p295 = scmp.eq.s32.totalorder %s44, 0
      %p296 = por %p294, %p295
      %s298 = sadd.s32 %s297, 1
      %p301 = scmp.eq.s32.totalorder %s38, 1
      %p302 = scmp.ne.s32.totalorder %s297, %s299
      %p303 = scmp.eq.s32.totalorder %s38, 0
      %p304 = por %p302, %p303
      %p305 = scmp.ne.s32.totalorder %s297, %s299
      %p306 = scmp.eq.s32.totalorder %s43, 1
      %p307 = por %p305, %p306
      %p308 = scmp.ne.s32.totalorder %s299, %s300
      %p309 = scmp.eq.s32.totalorder %s43, 0
      %p310 = por %p308, %p309
      %p311 = scmp.ne.s32.totalorder %s299, %s300
      %p312 = scmp.eq.s32.totalorder %s44, 1
      %p313 = por %p311, %p312
      %p315 = scmp.ne.s32.totalorder %s300, %s314
      %p316 = scmp.eq.s32.totalorder %s44, 0
      %p317 = por %p315, %p316
      %s319 = sadd.s32 %s318, 1
      %p322 = scmp.eq.s32.totalorder %s38, 1
      %p323 = scmp.ne.s32.totalorder %s318, %s320
      %p324 = scmp.eq.s32.totalorder %s38, 0
      %p325 = por %p323, %p324
      %p326 = scmp.ne.s32.totalorder %s318, %s320
      %p327 = scmp.eq.s32.totalorder %s43, 1
      %p328 = por %p326, %p327
      %p329 = scmp.ne.s32.totalorder %s320, %s321
      %p330 = scmp.eq.s32.totalorder %s43, 0
      %p331 = por %p329, %p330
      %p332 = scmp.ne.s32.totalorder %s320, %s321
      %p333 = scmp.eq.s32.totalorder %s44, 1
      %p334 = por %p332, %p333
      %p336 = scmp.ne.s32.totalorder %s321, %s335
      %p337 = scmp.eq.s32.totalorder %s44, 0
      %p338 = por %p336, %p337
      %s340 = sadd.s32 %s339, 1
      %p343 = scmp.eq.s32.totalorder %s38, 1
      %p344 = scmp.ne.s32.totalorder %s339, %s341
      %p345 = scmp.eq.s32.totalorder %s38, 0
      %p346 = por %p344, %p345
      %p347 = scmp.ne.s32.totalorder %s339, %s341
      %p348 = scmp.eq.s32.totalorder %s43, 1
      %p349 = por %p347, %p348
      %p350 = scmp.ne.s32.totalorder %s341, %s342
      %p351 = scmp.eq.s32.totalorder %s43, 0
      %p352 = por %p350, %p351
      %p353 = scmp.ne.s32.totalorder %s341, %s342
      %p354 = scmp.eq.s32.totalorder %s44, 1
      %p355 = por %p353, %p354
      %p357 = scmp.ne.s32.totalorder %s342, %s356
      %p358 = scmp.eq.s32.totalorder %s44, 0
      %p359 = por %p357, %p358
      %s361 = sadd.s32 %s360, 1
      %p364 = scmp.eq.s32.totalorder %s38, 1
      %p365 = scmp.ne.s32.totalorder %s360, %s362
      %p366 = scmp.eq.s32.totalorder %s38, 0
      %p367 = por %p365, %p366
      %p368 = scmp.ne.s32.totalorder %s360, %s362
      %p369 = scmp.eq.s32.totalorder %s43, 1
      %p370 = por %p368, %p369
      %p371 = scmp.ne.s32.totalorder %s362, %s363
      %p372 = scmp.eq.s32.totalorder %s43, 0
      %p373 = por %p371, %p372
      %p374 = scmp.ne.s32.totalorder %s362, %s363
      %p375 = scmp.eq.s32.totalorder %s44, 1
      %p376 = por %p374, %p375
      %p378 = scmp.ne.s32.totalorder %s363, %s377
      %p379 = scmp.eq.s32.totalorder %s44, 0
      %p380 = por %p378, %p379
      %s382 = sadd.s32 %s381, 1
      %p385 = scmp.eq.s32.totalorder %s38, 1
      %p386 = scmp.ne.s32.totalorder %s381, %s383
      %p387 = scmp.eq.s32.totalorder %s38, 0
      %p388 = por %p386, %p387
      %p389 = scmp.ne.s32.totalorder %s381, %s383
      %p390 = scmp.eq.s32.totalorder %s43, 1
      %p391 = por %p389, %p390
      %p392 = scmp.ne.s32.totalorder %s383, %s384
      %p393 = scmp.eq.s32.totalorder %s43, 0
      %p394 = por %p392, %p393
      %p395 = scmp.ne.s32.totalorder %s383, %s384
      %p396 = scmp.eq.s32.totalorder %s44, 1
      %p397 = por %p395, %p396
      %p399 = scmp.ne.s32.totalorder %s384, %s398
      %p400 = scmp.eq.s32.totalorder %s44, 0
      %p401 = por %p399, %p400
      %s403 = sadd.s32 %s402, 1
      %p406 = scmp.eq.s32.totalorder %s38, 1
      %p407 = scmp.ne.s32.totalorder %s402, %s404
      %p408 = scmp.eq.s32.totalorder %s38, 0
      %p409 = por %p407, %p408
      %p410 = scmp.ne.s32.totalorder %s402, %s404
      %p411 = scmp.eq.s32.totalorder %s43, 1
      %p412 = por %p410, %p411
      %p413 = scmp.ne.s32.totalorder %s404, %s405
      %p414 = scmp.eq.s32.totalorder %s43, 0
      %p415 = por %p413, %p414
      %p416 = scmp.ne.s32.totalorder %s404, %s405
      %p417 = scmp.eq.s32.totalorder %s44, 1
      %p418 = por %p416, %p417
      %p420 = scmp.ne.s32.totalorder %s405, %s419
      %p421 = scmp.eq.s32.totalorder %s44, 0
      %p422 = por %p420, %p421
      %s423 = ssub.s32 %s38, %s45
      %p424 = scmp.eq.s32.totalorder %s423, 0
      %s426 = sadd.s32 %s425, 1
      %s427 = scalar_select %p424, %s425, %s426
      %p430 = pneg %p424
      %p431 = scmp.eq.s32.totalorder %s38, 1
      %p432 = por %p430, %p431
      %p433 = scmp.ne.s32.totalorder %s425, %s428
      %p434 = scmp.eq.s32.totalorder %s38, 0
      %p435 = por %p433, %p434
      %p436 = scmp.ne.s32.totalorder %s425, %s428
      %p437 = scmp.eq.s32.totalorder %s43, 1
      %p438 = por %p436, %p437
      %p439 = scmp.ne.s32.totalorder %s428, %s429
      %p440 = scmp.eq.s32.totalorder %s43, 0
      %p441 = por %p439, %p440
      %p442 = scmp.ne.s32.totalorder %s428, %s429
      %p443 = scmp.eq.s32.totalorder %s44, 1
      %p444 = por %p442, %p443
      %p446 = scmp.ne.s32.totalorder %s429, %s445
      %p447 = scmp.eq.s32.totalorder %s44, 0
      %p448 = por %p446, %p447
      %p449 = scmp.le.s32.totalorder 1, %s38
      %p450 = scmp.lt.s32.totalorder %s38, 3
      %p451 = pnand %p449, %p450
      %p452 = pneg %p451
      // Predicated region
      $region9: #{tpu_custom_call.1} parent=5 // pred_check
        _
      $region10: #{tpu_custom_call.1} parent=5 // pred_check_branch
        %454 = sbr.rel (%p451) target = $region12
      $region11: #{tpu_custom_call.1} parent=5 // pred_region
        %s455 = ssub.s32 %s38, 1
        // Predicated region
        $region13: #{tpu_custom_call.1} parent=11 // pred_check
          %p456 = pneg %p163
        $region14: #{tpu_custom_call.1} parent=11 // pred_check_branch
          %458 = sbr.rel (%p456) target = $region16
        $region15: #{tpu_custom_call.1} parent=11 // pred_region
          _
        $region16: #{tpu_custom_call.1} parent=11 // pred_fallthru
          _
        // Predicated region
        $region17: #{tpu_custom_call.1} parent=11 // pred_check
          %p459 = pneg %p184
        $region18: #{tpu_custom_call.1} parent=11 // pred_check_branch
          %461 = sbr.rel (%p459) target = $region20
        $region19: #{tpu_custom_call.1} parent=11 // pred_region
          %s463 = ssub.s32 1024, 1024
          %464 = vsyncadd [#allocation9], %s463
          %s465 = sshll.u32 [#allocation10], 4
          %s466 = int_to_ptr.vmem [resolvable:$true] %s465
          %471 = dma.hbm_to_vmem [thread:$0]  %s5, 1024, %s466, [#allocation9], 64, 64, 4
        $region20: #{tpu_custom_call.1} parent=11 // pred_fallthru
          _
        // Predicated region
        $region21: #{tpu_custom_call.1} parent=11 // pred_check
          %p472 = pneg %p205
        $region22: #{tpu_custom_call.1} parent=11 // pred_check_branch
          %474 = sbr.rel (%p472) target = $region24
        $region23: #{tpu_custom_call.1} parent=11 // pred_region
          _
        $region24: #{tpu_custom_call.1} parent=11 // pred_fallthru
          _
        // Predicated region
        $region25: #{tpu_custom_call.1} parent=11 // pred_check
          %p475 = pneg %p226
        $region26: #{tpu_custom_call.1} parent=11 // pred_check_branch
          %477 = sbr.rel (%p475) target = $region28
        $region27: #{tpu_custom_call.1} parent=11 // pred_region
          %s479 = ssub.s32 1024, 1024
          %480 = vsyncadd [#allocation12], %s479
          %s481 = sshll.u32 [#allocation11], 4
          %s482 = int_to_ptr.vmem [resolvable:$true] %s481
          %487 = dma.hbm_to_vmem [thread:$0]  %s7, 1024, %s482, [#allocation12], 64, 64, 4
        $region28: #{tpu_custom_call.1} parent=11 // pred_fallthru
          _
        // Predicated region
        $region29: #{tpu_custom_call.1} parent=11 // pred_check
          %p488 = pneg %p247
        $region30: #{tpu_custom_call.1} parent=11 // pred_check_branch
          %490 = sbr.rel (%p488) target = $region32
        $region31: #{tpu_custom_call.1} parent=11 // pred_region
          _
        $region32: #{tpu_custom_call.1} parent=11 // pred_fallthru
          _
        // Predicated region
        $region33: #{tpu_custom_call.1} parent=11 // pred_check
          %p491 = pneg %p268
        $region34: #{tpu_custom_call.1} parent=11 // pred_check_branch
          %493 = sbr.rel (%p491) target = $region36
        $region35: #{tpu_custom_call.1} parent=11 // pred_region
          %s495 = ssub.s32 1024, 1024
          %496 = vsyncadd [#allocation12], %s495
          %s497 = sshll.u32 [#allocation13], 4
          %s498 = int_to_ptr.vmem [resolvable:$true] %s497
          %503 = dma.hbm_to_vmem [thread:$0]  %s9, 1024, %s498, [#allocation12], 64, 64, 4
        $region36: #{tpu_custom_call.1} parent=11 // pred_fallthru
          _
        // Predicated region
        $region37: #{tpu_custom_call.1} parent=11 // pred_check
          %p504 = pneg %p289
        $region38: #{tpu_custom_call.1} parent=11 // pred_check_branch
          %506 = sbr.rel (%p504) target = $region40
        $region39: #{tpu_custom_call.1} parent=11 // pred_region
          _
        $region40: #{tpu_custom_call.1} parent=11 // pred_fallthru
          _
        // Predicated region
        $region41: #{tpu_custom_call.1} parent=11 // pred_check
          %p507 = pneg %p310
        $region42: #{tpu_custom_call.1} parent=11 // pred_check_branch
          %509 = sbr.rel (%p507) target = $region44
        $region43: #{tpu_custom_call.1} parent=11 // pred_region
          %s511 = ssub.s32 1024, 1024
          %512 = vsyncadd [#allocation15], %s511
          %s513 = sshll.u32 [#allocation14], 4
          %s514 = int_to_ptr.vmem [resolvable:$true] %s513
          %519 = dma.hbm_to_vmem [thread:$0]  %s11, 1024, %s514, [#allocation15], 64, 64, 4
        $region44: #{tpu_custom_call.1} parent=11 // pred_fallthru
          _
        // Predicated region
        $region45: #{tpu_custom_call.1} parent=11 // pred_check
          %p520 = pneg %p331
        $region46: #{tpu_custom_call.1} parent=11 // pred_check_branch
          %522 = sbr.rel (%p520) target = $region48
        $region47: #{tpu_custom_call.1} parent=11 // pred_region
          _
        $region48: #{tpu_custom_call.1} parent=11 // pred_fallthru
          _
        // Predicated region
        $region49: #{tpu_custom_call.1} parent=11 // pred_check
          %p523 = pneg %p352
        $region50: #{tpu_custom_call.1} parent=11 // pred_check_branch
          %525 = sbr.rel (%p523) target = $region52
        $region51: #{tpu_custom_call.1} parent=11 // pred_region
          %s527 = ssub.s32 8192, 8192
          %528 = vsyncadd [#allocation15], %s527
          %s529 = sshll.u32 [#allocation16], 4
          %s530 = int_to_ptr.vmem [resolvable:$true] %s529
          %535 = dma.hbm_to_vmem [thread:$0]  %s13, 8192, %s530, [#allocation15], 128, 128, 8
        $region52: #{tpu_custom_call.1} parent=11 // pred_fallthru
          _
        // Predicated region
        $region53: #{tpu_custom_call.1} parent=11 // pred_check
          %p536 = pneg %p373
        $region54: #{tpu_custom_call.1} parent=11 // pred_check_branch
          %538 = sbr.rel (%p536) target = $region56
        $region55: #{tpu_custom_call.1} parent=11 // pred_region
          _
        $region56: #{tpu_custom_call.1} parent=11 // pred_fallthru
          _
        // Predicated region
        $region57: #{tpu_custom_call.1} parent=11 // pred_check
          %p539 = pneg %p394
        $region58: #{tpu_custom_call.1} parent=11 // pred_check_branch
          %541 = sbr.rel (%p539) target = $region60
        $region59: #{tpu_custom_call.1} parent=11 // pred_region
          %s543 = ssub.s32 4096, 4096
          %544 = vsyncadd [#allocation18], %s543
          %s545 = sshll.u32 [#allocation17], 4
          %s546 = int_to_ptr.vmem [resolvable:$true] %s545
          %551 = dma.hbm_to_vmem [thread:$0]  %s15, 4096, %s546, [#allocation18], 128, 128, 8
        $region60: #{tpu_custom_call.1} parent=11 // pred_fallthru
          _
        // Predicated region
        $region61: #{tpu_custom_call.1} parent=11 // pred_check
          %p552 = pneg %p415
        $region62: #{tpu_custom_call.1} parent=11 // pred_check_branch
          %554 = sbr.rel (%p552) target = $region64
        $region63: #{tpu_custom_call.1} parent=11 // pred_region
          _
        $region64: #{tpu_custom_call.1} parent=11 // pred_fallthru
          _
      $region12: #{tpu_custom_call.1} parent=5 // pred_fallthru
        _
      %p555 = scmp.lt.s32.totalorder %s38, 2
      // Predicated region
      $region65: #{tpu_custom_call.1} parent=5 // pred_check
        %p556 = pneg %p555
      $region66: #{tpu_custom_call.1} parent=5 // pred_check_branch
        %558 = sbr.rel (%p556) target = $region68
      $region67: #{tpu_custom_call.1} parent=5 // pred_region
        // Predicated region
        $region69: #{tpu_custom_call.1} parent=67 // pred_check
          %p559 = pneg %p58
        $region70: #{tpu_custom_call.1} parent=67 // pred_check_branch
          %561 = sbr.rel (%p559) target = $region72
        $region71: #{tpu_custom_call.1} parent=67 // pred_region
          %s562 = sand.u32 %s48, 1
          %s563 = scalar_lea.sflag [#allocation3], %s562
          %s564 = sand.u32 %s48, 1
          %s565 = smul.addr %s564, 8
          %s566 = scalar_lea.vmem [#allocation2], %s565
          %s567 = smul.u32 2, %s38
          %s569 = ssub.s32 128, 128
          %570 = vsyncadd %s563, %s569
          %s571 = smul.addr %s567, 64
          %s572 = scalar_lea.hbm %s0, %s571
          %s573 = sshll.u32 %s566, 4
          %s574 = int_to_ptr.vmem [resolvable:$true] %s573
          %579 = dma.hbm_to_vmem [thread:$0]  %s572, 128, %s574, %s563, 64, 64, 4
        $region72: #{tpu_custom_call.1} parent=67 // pred_fallthru
          _
        // Predicated region
        $region73: #{tpu_custom_call.1} parent=67 // pred_check
          %p580 = pneg %p84
        $region74: #{tpu_custom_call.1} parent=67 // pred_check_branch
          %582 = sbr.rel (%p580) target = $region76
        $region75: #{tpu_custom_call.1} parent=67 // pred_region
          %s583 = sand.u32 %s38, 1
          %s584 = scalar_lea.sflag [#allocation6], %s583
          %s585 = sand.u32 %s74, 1
          %s586 = smul.addr %s585, 8
          %s587 = scalar_lea.vmem [#allocation5], %s586
          %s588 = smul.u32 2, %s38
          %s590 = ssub.s32 128, 128
          %591 = vsyncadd %s584, %s590
          %s592 = smul.addr %s588, 64
          %s593 = scalar_lea.hbm %s1, %s592
          %s594 = sshll.u32 %s587, 4
          %s595 = int_to_ptr.vmem [resolvable:$true] %s594
          %600 = dma.hbm_to_vmem [thread:$0]  %s593, 128, %s595, %s584, 64, 64, 4
        $region76: #{tpu_custom_call.1} parent=67 // pred_fallthru
          _
        // Predicated region
        $region77: #{tpu_custom_call.1} parent=67 // pred_check
          %p601 = pneg %p110
        $region78: #{tpu_custom_call.1} parent=67 // pred_check_branch
          %603 = sbr.rel (%p601) target = $region80
        $region79: #{tpu_custom_call.1} parent=67 // pred_region
          %s604 = sand.u32 %s38, 1
          %s605 = scalar_lea.sflag [#allocation6], %s604
          %s606 = sand.u32 %s100, 1
          %s607 = smul.addr %s606, 64
          %s608 = scalar_lea.vmem [#allocation7], %s607
          %s609 = smul.u32 16, %s38
          %s611 = ssub.s32 1024, 1024
          %612 = vsyncadd %s605, %s611
          %s613 = smul.addr %s609, 64
          %s614 = scalar_lea.hbm %s2, %s613
          %s615 = sshll.u32 %s608, 4
          %s616 = int_to_ptr.vmem [resolvable:$true] %s615
          %621 = dma.hbm_to_vmem [thread:$0]  %s614, 1024, %s616, %s605, 64, 64, 4
        $region80: #{tpu_custom_call.1} parent=67 // pred_fallthru
          _
        // Predicated region
        $region81: #{tpu_custom_call.1} parent=67 // pred_check
          %p622 = pneg %p136
        $region82: #{tpu_custom_call.1} parent=67 // pred_check_branch
          %624 = sbr.rel (%p622) target = $region84
        $region83: #{tpu_custom_call.1} parent=67 // pred_region
          %s625 = sand.u32 %s38, 1
          %s626 = scalar_lea.sflag [#allocation9], %s625
          %s627 = sand.u32 %s126, 1
          %s628 = smul.addr %s627, 8
          %s629 = scalar_lea.vmem [#allocation8], %s628
          %s630 = smul.u32 2, %s38
          %s632 = ssub.s32 128, 128
          %633 = vsyncadd %s626, %s632
          %s634 = smul.addr %s630, 64
          %s635 = scalar_lea.hbm %s3, %s634
          %s636 = sshll.u32 %s629, 4
          %s637 = int_to_ptr.vmem [resolvable:$true] %s636
          %642 = dma.hbm_to_vmem [thread:$0]  %s635, 128, %s637, %s626, 64, 64, 4
        $region84: #{tpu_custom_call.1} parent=67 // pred_fallthru
          _
      $region68: #{tpu_custom_call.1} parent=5 // pred_fallthru
        _
      %p643 = scmp.le.s32.totalorder 1, %s38
      %p644 = scmp.lt.s32.totalorder %s38, 3
      %p645 = pnand %p643, %p644
      %p646 = pneg %p645
      // Predicated region
      $region85: #{tpu_custom_call.1} parent=5 // pred_check
        _
      $region86: #{tpu_custom_call.1} parent=5 // pred_check_branch
        %648 = sbr.rel (%p645) target = $region88
      $region87: #{tpu_custom_call.1} parent=5 // pred_region
        %s649 = ssub.s32 %s38, 1
        %s650 = sand.u32 %s51, 1
        %s651 = scalar_lea.sflag [#allocation3], %s650
        %s652 = sand.u32 %s51, 1
        %s653 = smul.addr %s652, 8
        %s654 = scalar_lea.vmem [#allocation2], %s653
        // Predicated region
        $region89: #{tpu_custom_call.1} parent=87 // pred_check
          %p655 = pneg %p64
        $region90: #{tpu_custom_call.1} parent=87 // pred_check_branch
          %657 = sbr.rel (%p655) target = $region92
        $region91: #{tpu_custom_call.1} parent=87 // pred_region
          %658 = dma.done %s651, 128
        $region92: #{tpu_custom_call.1} parent=87 // pred_fallthru
          _
        %s659 = sand.u32 %s43, 1
        %s660 = scalar_lea.sflag [#allocation6], %s659
        %s661 = sand.u32 %s77, 1
        %s662 = smul.addr %s661, 8
        %s663 = scalar_lea.vmem [#allocation5], %s662
        // Predicated region
        $region93: #{tpu_custom_call.1} parent=87 // pred_check
          %p664 = pneg %p90
        $region94: #{tpu_custom_call.1} parent=87 // pred_check_branch
          %666 = sbr.rel (%p664) target = $region96
        $region95: #{tpu_custom_call.1} parent=87 // pred_region
          %667 = dma.done %s660, 128
        $region96: #{tpu_custom_call.1} parent=87 // pred_fallthru
          _
        %s668 = sand.u32 %s43, 1
        %s669 = scalar_lea.sflag [#allocation6], %s668
        %s670 = sand.u32 %s103, 1
        %s671 = smul.addr %s670, 64
        %s672 = scalar_lea.vmem [#allocation7], %s671
        // Predicated region
        $region97: #{tpu_custom_call.1} parent=87 // pred_check
          %p673 = pneg %p116
        $region98: #{tpu_custom_call.1} parent=87 // pred_check_branch
          %675 = sbr.rel (%p673) target = $region100
        $region99: #{tpu_custom_call.1} parent=87 // pred_region
          %676 = dma.done %s669, 1024
        $region100: #{tpu_custom_call.1} parent=87 // pred_fallthru
          _
        %s677 = sand.u32 %s43, 1
        %s678 = scalar_lea.sflag [#allocation9], %s677
        %s679 = sand.u32 %s129, 1
        %s680 = smul.addr %s679, 8
        %s681 = scalar_lea.vmem [#allocation8], %s680
        // Predicated region
        $region101: #{tpu_custom_call.1} parent=87 // pred_check
          %p682 = pneg %p142
        $region102: #{tpu_custom_call.1} parent=87 // pred_check_branch
          %684 = sbr.rel (%p682) target = $region104
        $region103: #{tpu_custom_call.1} parent=87 // pred_region
          %685 = dma.done %s678, 128
        $region104: #{tpu_custom_call.1} parent=87 // pred_fallthru
          _
        // Predicated region
        $region105: #{tpu_custom_call.1} parent=87 // pred_check
          %p686 = pneg %p184
        $region106: #{tpu_custom_call.1} parent=87 // pred_check_branch
          %688 = sbr.rel (%p686) target = $region108
        $region107: #{tpu_custom_call.1} parent=87 // pred_region
          %689 = dma.done [#allocation9], 1024
        $region108: #{tpu_custom_call.1} parent=87 // pred_fallthru
          _
        // Predicated region
        $region109: #{tpu_custom_call.1} parent=87 // pred_check
          %p690 = pneg %p226
        $region110: #{tpu_custom_call.1} parent=87 // pred_check_branch
          %692 = sbr.rel (%p690) target = $region112
        $region111: #{tpu_custom_call.1} parent=87 // pred_region
          %693 = dma.done [#allocation12], 1024
        $region112: #{tpu_custom_call.1} parent=87 // pred_fallthru
          _
        // Predicated region
        $region113: #{tpu_custom_call.1} parent=87 // pred_check
          %p694 = pneg %p268
        $region114: #{tpu_custom_call.1} parent=87 // pred_check_branch
          %696 = sbr.rel (%p694) target = $region116
        $region115: #{tpu_custom_call.1} parent=87 // pred_region
          %697 = dma.done [#allocation12], 1024
        $region116: #{tpu_custom_call.1} parent=87 // pred_fallthru
          _
        // Predicated region
        $region117: #{tpu_custom_call.1} parent=87 // pred_check
          %p698 = pneg %p310
        $region118: #{tpu_custom_call.1} parent=87 // pred_check_branch
          %700 = sbr.rel (%p698) target = $region120
        $region119: #{tpu_custom_call.1} parent=87 // pred_region
          %701 = dma.done [#allocation15], 1024
        $region120: #{tpu_custom_call.1} parent=87 // pred_fallthru
          _
        // Predicated region
        $region121: #{tpu_custom_call.1} parent=87 // pred_check
          %p702 = pneg %p352
        $region122: #{tpu_custom_call.1} parent=87 // pred_check_branch
          %704 = sbr.rel (%p702) target = $region124
        $region123: #{tpu_custom_call.1} parent=87 // pred_region
          %705 = dma.done [#allocation15], 8192
        $region124: #{tpu_custom_call.1} parent=87 // pred_fallthru
          _
        // Predicated region
        $region125: #{tpu_custom_call.1} parent=87 // pred_check
          %p706 = pneg %p394
        $region126: #{tpu_custom_call.1} parent=87 // pred_check_branch
          %708 = sbr.rel (%p706) target = $region128
        $region127: #{tpu_custom_call.1} parent=87 // pred_region
          %709 = dma.done [#allocation18], 4096
        $region128: #{tpu_custom_call.1} parent=87 // pred_fallthru
          _
        %s710 = sand.u32 %s51, 1
        %s711 = scalar_lea.sflag [#allocation3], %s710
        %s712 = sand.u32 %s51, 1
        %s713 = smul.addr %s712, 8
        %s714 = scalar_lea.vmem [#allocation2], %s713
        %p715 = pneg %p64
        %p716 = pneg %p61
        %s717 = sand.u32 %s43, 1
        %s718 = scalar_lea.sflag [#allocation6], %s717
        %s719 = sand.u32 %s77, 1
        %s720 = smul.addr %s719, 8
        %s721 = scalar_lea.vmem [#allocation5], %s720
        %p722 = pneg %p90
        %p723 = pneg %p87
        %s724 = sand.u32 %s43, 1
        %s725 = scalar_lea.sflag [#allocation6], %s724
        %s726 = sand.u32 %s103, 1
        %s727 = smul.addr %s726, 64
        %s728 = scalar_lea.vmem [#allocation7], %s727
        %p729 = pneg %p116
        %p730 = pneg %p113
        %s731 = sand.u32 %s43, 1
        %s732 = scalar_lea.sflag [#allocation9], %s731
        %s733 = sand.u32 %s129, 1
        %s734 = smul.addr %s733, 8
        %s735 = scalar_lea.vmem [#allocation8], %s734
        %p736 = pneg %p142
        %p737 = pneg %p139
        %p738 = pneg %p163
        %p739 = pneg %p160
        %p740 = pneg %p184
        %p741 = pneg %p181
        %p742 = pneg %p205
        %p743 = pneg %p202
        %p744 = pneg %p226
        %p745 = pneg %p223
        %p746 = pneg %p247
        %p747 = pneg %p244
        %p748 = pneg %p268
        %p749 = pneg %p265
        %p750 = pneg %p289
        %p751 = pneg %p286
        %p752 = pneg %p310
        %p753 = pneg %p307
        %p754 = pneg %p331
        %p755 = pneg %p328
        %p756 = pneg %p352
        %p757 = pneg %p349
        %p758 = pneg %p373
        %p759 = pneg %p370
        %p760 = pneg %p394
        %p761 = pneg %p391
        %p762 = pneg %p415
        %p763 = pneg %p412
        %p764 = pneg %p441
        %p765 = pneg %p438
        %s766 = sand.u32 %s428, 1
        %s767 = scalar_lea.sflag [#allocation4], %s766
        %s768 = sand.u32 %s428, 1
        %s769 = smul.addr %s768, 32
        %s770 = scalar_lea.vmem [#allocation19], %s769
        %s771 = smul.u32 2, %s43
        %s772 = smul.u32 2, %s43
        %s773 = smul.u32 16, %s43
        %s774 = smul.u32 2, %s43
        %s775 = smul.u32 2, %s43
        %v777 = vld [vmem:[%s672] sm:$0xf]
        %v778 = vld [vmem:[%s672 + $0x4] sm:$0xf]
        %v779 = vld [vmem:[%s672 + $0x8] sm:$0xf]
        %v780 = vld [vmem:[%s672 + $0xc] sm:$0xf]
        %v781 = vld [vmem:[%s672 + $0x10] sm:$0xf]
        %v782 = vld [vmem:[%s672 + $0x14] sm:$0xf]
        %v783 = vld [vmem:[%s672 + $0x18] sm:$0xf]
        %v784 = vld [vmem:[%s672 + $0x1c] sm:$0xf]
        %v785 = vld [vmem:[%s672 + $0x20] sm:$0xf]
        %v786 = vld [vmem:[%s672 + $0x24] sm:$0xf]
        %v787 = vld [vmem:[%s672 + $0x28] sm:$0xf]
        %v788 = vld [vmem:[%s672 + $0x2c] sm:$0xf]
        %v789 = vld [vmem:[%s672 + $0x30] sm:$0xf]
        %v790 = vld [vmem:[%s672 + $0x34] sm:$0xf]
        %v791 = vld [vmem:[%s672 + $0x38] sm:$0xf]
        %v792 = vld [vmem:[%s672 + $0x3c] sm:$0xf]
        %v793 = vld [vmem:[#allocation10] sm:$0xf]
        %v794 = vld [vmem:[#allocation10 + $0x4] sm:$0xf]
        %v795 = vld [vmem:[#allocation10 + $0x8] sm:$0xf]
        %v796 = vld [vmem:[#allocation10 + $0xc] sm:$0xf]
        %v797 = vld [vmem:[#allocation10 + $0x10] sm:$0xf]
        %v798 = vld [vmem:[#allocation10 + $0x14] sm:$0xf]
        %v799 = vld [vmem:[#allocation10 + $0x18] sm:$0xf]
        %v800 = vld [vmem:[#allocation10 + $0x1c] sm:$0xf]
        %v801 = vld [vmem:[#allocation10 + $0x20] sm:$0xf]
        %v802 = vld [vmem:[#allocation10 + $0x24] sm:$0xf]
        %v803 = vld [vmem:[#allocation10 + $0x28] sm:$0xf]
        %v804 = vld [vmem:[#allocation10 + $0x2c] sm:$0xf]
        %v805 = vld [vmem:[#allocation10 + $0x30] sm:$0xf]
        %v806 = vld [vmem:[#allocation10 + $0x34] sm:$0xf]
        %v807 = vld [vmem:[#allocation10 + $0x38] sm:$0xf]
        %v808 = vld [vmem:[#allocation10 + $0x3c] sm:$0xf]
        %v809 = vld [vmem:[%s6] sm:$0x1]
        %v811 = vlaneseq
        %v812 = vshrl.u32 %v811, 7
        %v813 = vsub.s32 0, %v812
        %v814 = vrot.slane %v809, %v813
        %v832 = vunpack.c.l.b16 %v777
        %v833 = vunpack.c.l.b16 %v778
        %v834 = vunpack.c.l.b16 %v779
        %v835 = vunpack.c.l.b16 %v780
        %v836 = vunpack.c.l.b16 %v781
        %v837 = vunpack.c.l.b16 %v782
        %v838 = vunpack.c.l.b16 %v783
        %v839 = vunpack.c.l.b16 %v784
        %v840 = vunpack.c.l.b16 %v785
        %v841 = vunpack.c.l.b16 %v786
        %v842 = vunpack.c.l.b16 %v787
        %v843 = vunpack.c.l.b16 %v788
        %v844 = vunpack.c.l.b16 %v789
        %v845 = vunpack.c.l.b16 %v790
        %v846 = vunpack.c.l.b16 %v791
        %v847 = vunpack.c.l.b16 %v792
        %v848 = vpack.c.b16 %v833, %v832
        %v849 = vpack.c.b16 %v835, %v834
        %v850 = vpack.c.b16 %v837, %v836
        %v851 = vpack.c.b16 %v839, %v838
        %v852 = vpack.c.b16 %v841, %v840
        %v853 = vpack.c.b16 %v843, %v842
        %v854 = vpack.c.b16 %v845, %v844
        %v855 = vpack.c.b16 %v847, %v846
        %v880 = vunpack.c.l.b16 %v793
        %v881 = vunpack.c.l.b16 %v794
        %v882 = vunpack.c.l.b16 %v795
        %v883 = vunpack.c.l.b16 %v796
        %v884 = vunpack.c.l.b16 %v797
        %v885 = vunpack.c.l.b16 %v798
        %v886 = vunpack.c.l.b16 %v799
        %v887 = vunpack.c.l.b16 %v800
        %v888 = vunpack.c.l.b16 %v801
        %v889 = vunpack.c.l.b16 %v802
        %v890 = vunpack.c.l.b16 %v803
        %v891 = vunpack.c.l.b16 %v804
        %v892 = vunpack.c.l.b16 %v805
        %v893 = vunpack.c.l.b16 %v806
        %v894 = vunpack.c.l.b16 %v807
        %v895 = vunpack.c.l.b16 %v808
        %v896 = vpack.c.b16 %v881, %v880
        %v897 = vpack.c.b16 %v883, %v882
        %v898 = vpack.c.b16 %v885, %v884
        %v899 = vpack.c.b16 %v887, %v886
        %v900 = vpack.c.b16 %v889, %v888
        %v901 = vpack.c.b16 %v891, %v890
        %v902 = vpack.c.b16 %v893, %v892
        %v903 = vpack.c.b16 %v895, %v894
        %912 = vmatprep.subr.bf16.mxu0 0
        %913 = vmatpush1.bf16.msra.mxu0 %v896
        %914 = vmatprep.subr.bf16.mxu0 0
        %915 = vmatpush1.bf16.msra.mxu0 %v897
        %916 = vmatprep.subr.bf16.mxu0 0
        %917 = vmatpush1.bf16.msra.mxu0 %v898
        %918 = vmatprep.subr.bf16.mxu0 0
        %919 = vmatpush1.bf16.msra.mxu0 %v899
        %920 = vmatprep.subr.bf16.mxu0 0
        %921 = vmatpush1.bf16.msra.mxu0 %v900
        %922 = vmatprep.subr.bf16.mxu0 0
        %923 = vmatpush1.bf16.msra.mxu0 %v901
        %924 = vmatprep.subr.bf16.mxu0 0
        %925 = vmatpush1.bf16.msra.mxu0 %v902
        %926 = vmatprep.subr.bf16.mxu0 0
        %927 = vmatpush1.bf16.msra.mxu0 %v903
        %928 = vmatprep.subr.bf16.mxu0 0
        %929 = vmatpush1.bf16.msra.mxu0 0
        %930 = vmatprep.subr.bf16.mxu0 0
        %931 = vmatpush1.bf16.msra.mxu0 0
        %932 = vmatprep.subr.bf16.mxu0 0
        %933 = vmatpush1.bf16.msra.mxu0 0
        %934 = vmatprep.subr.bf16.mxu0 0
        %935 = vmatpush1.bf16.msra.mxu0 0
        %936 = vmatprep.subr.bf16.mxu0 0
        %937 = vmatpush1.bf16.msra.mxu0 0
        %938 = vmatprep.subr.bf16.mxu0 0
        %939 = vmatpush1.bf16.msra.mxu0 0
        %940 = vmatprep.subr.bf16.mxu0 0
        %941 = vmatpush1.bf16.msra.mxu0 0
        %942 = vmatprep.subr.bf16.mxu0 0
        %943 = vmatpush1.bf16.msra.mxu0 0
        %944 = vmatprep.mubr.bf16.mxu0 0
        %945 = vmatmul.mubr.bf16.gmra.mrb[0].mxu0 %v848
        %v946 = vpop.f32.mrb[0].mxu0
        %v947 = vadd.f32 %v814, %v946
        %v948 = vpop.f32.mrb[0].mxu0
        %v949 = vpop.f32.mrb[0].mxu0
        %v950 = vadd.f32 %v814, %v949
        %v951 = vpop.f32.mrb[0].mxu0
        %952 = vmatprep.mubr.bf16.mxu0 0
        %953 = vmatmul.mubr.bf16.gmra.mrb[0].mxu0 %v849
        %v954 = vpop.f32.mrb[0].mxu0
        %v955 = vadd.f32 %v814, %v954
        %v956 = vpop.f32.mrb[0].mxu0
        %v957 = vpop.f32.mrb[0].mxu0
        %v958 = vadd.f32 %v814, %v957
        %v959 = vpop.f32.mrb[0].mxu0
        %960 = vmatprep.mubr.bf16.mxu0 0
        %961 = vmatmul.mubr.bf16.gmra.mrb[0].mxu0 %v850
        %v962 = vpop.f32.mrb[0].mxu0
        %v963 = vadd.f32 %v814, %v962
        %v964 = vpop.f32.mrb[0].mxu0
        %v965 = vpop.f32.mrb[0].mxu0
        %v966 = vadd.f32 %v814, %v965
        %v967 = vpop.f32.mrb[0].mxu0
        %968 = vmatprep.mubr.bf16.mxu0 0
        %969 = vmatmul.mubr.bf16.gmra.mrb[0].mxu0 %v851
        %v970 = vpop.f32.mrb[0].mxu0
        %v971 = vadd.f32 %v814, %v970
        %v972 = vpop.f32.mrb[0].mxu0
        %v973 = vpop.f32.mrb[0].mxu0
        %v974 = vadd.f32 %v814, %v973
        %v975 = vpop.f32.mrb[0].mxu0
        %976 = vmatprep.mubr.bf16.mxu0 0
        %977 = vmatmul.mubr.bf16.gmra.mrb[0].mxu0 %v852
        %v978 = vpop.f32.mrb[0].mxu0
        %v979 = vadd.f32 %v814, %v978
        %v980 = vpop.f32.mrb[0].mxu0
        %v981 = vpop.f32.mrb[0].mxu0
        %v982 = vadd.f32 %v814, %v981
        %v983 = vpop.f32.mrb[0].mxu0
        %984 = vmatprep.mubr.bf16.mxu0 0
        %985 = vmatmul.mubr.bf16.gmra.mrb[0].mxu0 %v853
        %v986 = vpop.f32.mrb[0].mxu0
        %v987 = vadd.f32 %v814, %v986
        %v988 = vpop.f32.mrb[0].mxu0
        %v989 = vpop.f32.mrb[0].mxu0
        %v990 = vadd.f32 %v814, %v989
        %v991 = vpop.f32.mrb[0].mxu0
        %992 = vmatprep.mubr.bf16.mxu0 0
        %993 = vmatmul.mubr.bf16.gmra.mrb[0].mxu0 %v854
        %v994 = vpop.f32.mrb[0].mxu0
        %v995 = vadd.f32 %v814, %v994
        %v996 = vpop.f32.mrb[0].mxu0
        %v997 = vpop.f32.mrb[0].mxu0
        %v998 = vadd.f32 %v814, %v997
        %v999 = vpop.f32.mrb[0].mxu0
        %1000 = vmatprep.mubr.bf16.mxu0 0
        %1001 = vmatmul.mubr.bf16.gmra.mrb[0].mxu0 %v855
        %v1002 = vpop.f32.mrb[0].mxu0
        %v1003 = vadd.f32 %v814, %v1002
        %v1004 = vpop.f32.mrb[0].mxu0
        %v1005 = vpop.f32.mrb[0].mxu0
        %v1006 = vadd.f32 %v814, %v1005
        %v1007 = vpop.f32.mrb[0].mxu0
        %1008 = vdwg.mxu0
        %v1009 = vmax.f32 %v947, 0.0
        %v1010 = vmax.f32 %v950, 0.0
        %v1011 = vmax.f32 %v955, 0.0
        %v1012 = vmax.f32 %v958, 0.0
        %v1013 = vmax.f32 %v963, 0.0
        %v1014 = vmax.f32 %v966, 0.0
        %v1015 = vmax.f32 %v971, 0.0
        %v1016 = vmax.f32 %v974, 0.0
        %v1017 = vmax.f32 %v979, 0.0
        %v1018 = vmax.f32 %v982, 0.0
        %v1019 = vmax.f32 %v987, 0.0
        %v1020 = vmax.f32 %v990, 0.0
        %v1021 = vmax.f32 %v995, 0.0
        %v1022 = vmax.f32 %v998, 0.0
        %v1023 = vmax.f32 %v1003, 0.0
        %v1024 = vmax.f32 %v1006, 0.0
        %v1025 = vld [vmem:[%s4] sm:$0xf]
        %v1026 = vld [vmem:[%s4 + $0x4] sm:$0xf]
        %v1027 = vpack.c.bf16 %v1010, %v1009
        %v1028 = vpack.c.bf16 %v1012, %v1011
        %v1029 = vpack.c.bf16 %v1014, %v1013
        %v1030 = vpack.c.bf16 %v1016, %v1015
        %v1031 = vpack.c.bf16 %v1018, %v1017
        %v1032 = vpack.c.bf16 %v1020, %v1019
        %v1033 = vpack.c.bf16 %v1022, %v1021
        %v1034 = vpack.c.bf16 %v1024, %v1023
        %v1037 = vunpack.c.l.b16 %v1025
        %v1038 = vunpack.c.l.b16 %v1026
        %v1039 = vpack.c.b16 %v1038, %v1037
        %1041 = vmatprep.subr.bf16.mxu0 0
        %1042 = vmatpush1.bf16.msra.mxu0 %v1027
        %1043 = vmatprep.subr.bf16.mxu0 0
        %1044 = vmatpush1.bf16.msra.mxu0 %v1028
        %1045 = vmatprep.subr.bf16.mxu0 0
        %1046 = vmatpush1.bf16.msra.mxu0 %v1029
        %1047 = vmatprep.subr.bf16.mxu0 0
        %1048 = vmatpush1.bf16.msra.mxu0 %v1030
        %1049 = vmatprep.subr.bf16.mxu0 0
        %1050 = vmatpush1.bf16.msra.mxu0 %v1031
        %1051 = vmatprep.subr.bf16.mxu0 0
        %1052 = vmatpush1.bf16.msra.mxu0 %v1032
        %1053 = vmatprep.subr.bf16.mxu0 0
        %1054 = vmatpush1.bf16.msra.mxu0 %v1033
        %1055 = vmatprep.subr.bf16.mxu0 0
        %1056 = vmatpush1.bf16.msra.mxu0 %v1034
        %1057 = vmatprep.subr.bf16.mxu0 0
        %1058 = vmatpush1.bf16.msra.mxu0 0
        %1059 = vmatprep.subr.bf16.mxu0 0
        %1060 = vmatpush1.bf16.msra.mxu0 0
        %1061 = vmatprep.subr.bf16.mxu0 0
        %1062 = vmatpush1.bf16.msra.mxu0 0
        %1063 = vmatprep.subr.bf16.mxu0 0
        %1064 = vmatpush1.bf16.msra.mxu0 0
        %1065 = vmatprep.subr.bf16.mxu0 0
        %1066 = vmatpush1.bf16.msra.mxu0 0
        %1067 = vmatprep.subr.bf16.mxu0 0
        %1068 = vmatpush1.bf16.msra.mxu0 0
        %1069 = vmatprep.subr.bf16.mxu0 0
        %1070 = vmatpush1.bf16.msra.mxu0 0
        %1071 = vmatprep.subr.bf16.mxu0 0
        %1072 = vmatpush1.bf16.msra.mxu0 0
        %1073 = vmatprep.mubr.bf16.mxu0 0
        %1074 = vmatmul.mubr.bf16.gmra.mrb[0].mxu0 %v1039
        %v1075 = vpop.f32.mrb[0].mxu0
        %v1076 = vadd.f32 0.0, %v1075
        %v1077 = vpop.f32.mrb[0].mxu0
        %v1078 = vpop.f32.mrb[0].mxu0
        %v1079 = vadd.f32 0.0, %v1078
        %v1080 = vpop.f32.mrb[0].mxu0
        %1081 = vdwg.mxu0
        %v1082 = vmul.f32 %v1076, 0.125
        %v1083 = vmul.f32 %v1079, 0.125
        %v1084 = vpack.c.bf16 %v1083, %v1082
        %v1085 = vld [vmem:[#allocation11] sm:$0xf]
        %v1086 = vld [vmem:[#allocation11 + $0x4] sm:$0xf]
        %v1087 = vld [vmem:[#allocation11 + $0x8] sm:$0xf]
        %v1088 = vld [vmem:[#allocation11 + $0xc] sm:$0xf]
        %v1089 = vld [vmem:[#allocation11 + $0x10] sm:$0xf]
        %v1090 = vld [vmem:[#allocation11 + $0x14] sm:$0xf]
        %v1091 = vld [vmem:[#allocation11 + $0x18] sm:$0xf]
        %v1092 = vld [vmem:[#allocation11 + $0x1c] sm:$0xf]
        %v1093 = vld [vmem:[#allocation11 + $0x20] sm:$0xf]
        %v1094 = vld [vmem:[#allocation11 + $0x24] sm:$0xf]
        %v1095 = vld [vmem:[#allocation11 + $0x28] sm:$0xf]
        %v1096 = vld [vmem:[#allocation11 + $0x2c] sm:$0xf]
        %v1097 = vld [vmem:[#allocation11 + $0x30] sm:$0xf]
        %v1098 = vld [vmem:[#allocation11 + $0x34] sm:$0xf]
        %v1099 = vld [vmem:[#allocation11 + $0x38] sm:$0xf]
        %v1100 = vld [vmem:[#allocation11 + $0x3c] sm:$0xf]
        %v1101 = vld [vmem:[%s8] sm:$0x1]
        %v1103 = vlaneseq
        %v1104 = vshrl.u32 %v1103, 7
        %v1105 = vsub.s32 0, %v1104
        %v1106 = vrot.slane %v1101, %v1105
        %v1124 = vunpack.c.l.b16 %v1085
        %v1125 = vunpack.c.l.b16 %v1086
        %v1126 = vunpack.c.l.b16 %v1087
        %v1127 = vunpack.c.l.b16 %v1088
        %v1128 = vunpack.c.l.b16 %v1089
        %v1129 = vunpack.c.l.b16 %v1090
        %v1130 = vunpack.c.l.b16 %v1091
        %v1131 = vunpack.c.l.b16 %v1092
        %v1132 = vunpack.c.l.b16 %v1093
        %v1133 = vunpack.c.l.b16 %v1094
        %v1134 = vunpack.c.l.b16 %v1095
        %v1135 = vunpack.c.l.b16 %v1096
        %v1136 = vunpack.c.l.b16 %v1097
        %v1137 = vunpack.c.l.b16 %v1098
        %v1138 = vunpack.c.l.b16 %v1099
        %v1139 = vunpack.c.l.b16 %v1100
        %v1140 = vpack.c.b16 %v1125, %v1124
        %v1141 = vpack.c.b16 %v1127, %v1126
        %v1142 = vpack.c.b16 %v1129, %v1128
        %v1143 = vpack.c.b16 %v1131, %v1130
        %v1144 = vpack.c.b16 %v1133, %v1132
        %v1145 = vpack.c.b16 %v1135, %v1134
        %v1146 = vpack.c.b16 %v1137, %v1136
        %v1147 = vpack.c.b16 %v1139, %v1138
        %1156 = vmatprep.subr.bf16.mxu0 0
        %1157 = vmatpush1.bf16.msra.mxu0 %v1140
        %1158 = vmatprep.subr.bf16.mxu0 0
        %1159 = vmatpush1.bf16.msra.mxu0 %v1141
        %1160 = vmatprep.subr.bf16.mxu0 0
        %1161 = vmatpush1.bf16.msra.mxu0 %v1142
        %1162 = vmatprep.subr.bf16.mxu0 0
        %1163 = vmatpush1.bf16.msra.mxu0 %v1143
        %1164 = vmatprep.subr.bf16.mxu0 0
        %1165 = vmatpush1.bf16.msra.mxu0 %v1144
        %1166 = vmatprep.subr.bf16.mxu0 0
        %1167 = vmatpush1.bf16.msra.mxu0 %v1145
        %1168 = vmatprep.subr.bf16.mxu0 0
        %1169 = vmatpush1.bf16.msra.mxu0 %v1146
        %1170 = vmatprep.subr.bf16.mxu0 0
        %1171 = vmatpush1.bf16.msra.mxu0 %v1147
        %1172 = vmatprep.subr.bf16.mxu0 0
        %1173 = vmatpush1.bf16.msra.mxu0 0
        %1174 = vmatprep.subr.bf16.mxu0 0
        %1175 = vmatpush1.bf16.msra.mxu0 0
        %1176 = vmatprep.subr.bf16.mxu0 0
        %1177 = vmatpush1.bf16.msra.mxu0 0
        %1178 = vmatprep.subr.bf16.mxu0 0
        %1179 = vmatpush1.bf16.msra.mxu0 0
        %1180 = vmatprep.subr.bf16.mxu0 0
        %1181 = vmatpush1.bf16.msra.mxu0 0
        %1182 = vmatprep.subr.bf16.mxu0 0
        %1183 = vmatpush1.bf16.msra.mxu0 0
        %1184 = vmatprep.subr.bf16.mxu0 0
        %1185 = vmatpush1.bf16.msra.mxu0 0
        %1186 = vmatprep.subr.bf16.mxu0 0
        %1187 = vmatpush1.bf16.msra.mxu0 0
        %1188 = vmatprep.mubr.bf16.mxu0 0
        %1189 = vmatmul.mubr.bf16.gmra.mrb[0].mxu0 %v1084
        %v1190 = vpop.f32.mrb[0].mxu0
        %v1191 = vadd.f32 %v1106, %v1190
        %v1192 = vpop.f32.mrb[0].mxu0
        %v1193 = vpop.f32.mrb[0].mxu0
        %v1194 = vadd.f32 %v1106, %v1193
        %v1195 = vpop.f32.mrb[0].mxu0
        %1196 = vdwg.mxu0
        %v1197 = vld [vmem:[%s681] sm:$0xf]
        %v1198 = vld [vmem:[%s681 + $0x4] sm:$0xf]
        %v1199 = vld [vmem:[#allocation13] sm:$0xf]
        %v1200 = vld [vmem:[#allocation13 + $0x4] sm:$0xf]
        %v1201 = vld [vmem:[#allocation13 + $0x8] sm:$0xf]
        %v1202 = vld [vmem:[#allocation13 + $0xc] sm:$0xf]
        %v1203 = vld [vmem:[#allocation13 + $0x10] sm:$0xf]
        %v1204 = vld [vmem:[#allocation13 + $0x14] sm:$0xf]
        %v1205 = vld [vmem:[#allocation13 + $0x18] sm:$0xf]
        %v1206 = vld [vmem:[#allocation13 + $0x1c] sm:$0xf]
        %v1207 = vld [vmem:[#allocation13 + $0x20] sm:$0xf]
        %v1208 = vld [vmem:[#allocation13 + $0x24] sm:$0xf]
        %v1209 = vld [vmem:[#allocation13 + $0x28] sm:$0xf]
        %v1210 = vld [vmem:[#allocation13 + $0x2c] sm:$0xf]
        %v1211 = vld [vmem:[#allocation13 + $0x30] sm:$0xf]
        %v1212 = vld [vmem:[#allocation13 + $0x34] sm:$0xf]
        %v1213 = vld [vmem:[#allocation13 + $0x38] sm:$0xf]
        %v1214 = vld [vmem:[#allocation13 + $0x3c] sm:$0xf]
        %v1215 = vld [vmem:[%s10] sm:$0x1]
        %v1217 = vlaneseq
        %v1218 = vshrl.u32 %v1217, 7
        %v1219 = vsub.s32 0, %v1218
        %v1220 = vrot.slane %v1215, %v1219
        %v1224 = vunpack.c.l.b16 %v1197
        %v1225 = vunpack.c.l.b16 %v1198
        %v1226 = vpack.c.b16 %v1225, %v1224
        %v1244 = vunpack.c.l.b16 %v1199
        %v1245 = vunpack.c.l.b16 %v1200
        %v1246 = vunpack.c.l.b16 %v1201
        %v1247 = vunpack.c.l.b16 %v1202
        %v1248 = vunpack.c.l.b16 %v1203
        %v1249 = vunpack.c.l.b16 %v1204
        %v1250 = vunpack.c.l.b16 %v1205
        %v1251 = vunpack.c.l.b16 %v1206
        %v1252 = vunpack.c.l.b16 %v1207
        %v1253 = vunpack.c.l.b16 %v1208
        %v1254 = vunpack.c.l.b16 %v1209
        %v1255 = vunpack.c.l.b16 %v1210
        %v1256 = vunpack.c.l.b16 %v1211
        %v1257 = vunpack.c.l.b16 %v1212
        %v1258 = vunpack.c.l.b16 %v1213
        %v1259 = vunpack.c.l.b16 %v1214
        %v1260 = vpack.c.b16 %v1245, %v1244
        %v1261 = vpack.c.b16 %v1247, %v1246
        %v1262 = vpack.c.b16 %v1249, %v1248
        %v1263 = vpack.c.b16 %v1251, %v1250
        %v1264 = vpack.c.b16 %v1253, %v1252
        %v1265 = vpack.c.b16 %v1255, %v1254
        %v1266 = vpack.c.b16 %v1257, %v1256
        %v1267 = vpack.c.b16 %v1259, %v1258
        %1276 = vmatprep.subr.bf16.mxu0 0
        %1277 = vmatpush1.bf16.msra.mxu0 %v1260
        %1278 = vmatprep.subr.bf16.mxu0 0
        %1279 = vmatpush1.bf16.msra.mxu0 %v1261
        %1280 = vmatprep.subr.bf16.mxu0 0
        %1281 = vmatpush1.bf16.msra.mxu0 %v1262
        %1282 = vmatprep.subr.bf16.mxu0 0
        %1283 = vmatpush1.bf16.msra.mxu0 %v1263
        %1284 = vmatprep.subr.bf16.mxu0 0
        %1285 = vmatpush1.bf16.msra.mxu0 %v1264
        %1286 = vmatprep.subr.bf16.mxu0 0
        %1287 = vmatpush1.bf16.msra.mxu0 %v1265
        %1288 = vmatprep.subr.bf16.mxu0 0
        %1289 = vmatpush1.bf16.msra.mxu0 %v1266
        %1290 = vmatprep.subr.bf16.mxu0 0
        %1291 = vmatpush1.bf16.msra.mxu0 %v1267
        %1292 = vmatprep.subr.bf16.mxu0 0
        %1293 = vmatpush1.bf16.msra.mxu0 0
        %1294 = vmatprep.subr.bf16.mxu0 0
        %1295 = vmatpush1.bf16.msra.mxu0 0
        %1296 = vmatprep.subr.bf16.mxu0 0
        %1297 = vmatpush1.bf16.msra.mxu0 0
        %1298 = vmatprep.subr.bf16.mxu0 0
        %1299 = vmatpush1.bf16.msra.mxu0 0
        %1300 = vmatprep.subr.bf16.mxu0 0
        %1301 = vmatpush1.bf16.msra.mxu0 0
        %1302 = vmatprep.subr.bf16.mxu0 0
        %1303 = vmatpush1.bf16.msra.mxu0 0
        %1304 = vmatprep.subr.bf16.mxu0 0
        %1305 = vmatpush1.bf16.msra.mxu0 0
        %1306 = vmatprep.subr.bf16.mxu0 0
        %1307 = vmatpush1.bf16.msra.mxu0 0
        %1308 = vmatprep.mubr.bf16.mxu0 0
        %1309 = vmatmul.mubr.bf16.gmra.mrb[0].mxu0 %v1226
        %v1310 = vpop.f32.mrb[0].mxu0
        %v1311 = vadd.f32 %v1220, %v1310
        %v1312 = vpop.f32.mrb[0].mxu0
        %v1313 = vpop.f32.mrb[0].mxu0
        %v1314 = vadd.f32 %v1220, %v1313
        %v1315 = vpop.f32.mrb[0].mxu0
        %1316 = vdwg.mxu0
        %v1317 = vmax.f32 %v1311, 0.0
        %v1318 = vmax.f32 %v1314, 0.0
        %v1319 = vpack.c.bf16 %v1318, %v1317
        %v1320 = vld [vmem:[#allocation14] sm:$0xf]
        %v1321 = vld [vmem:[#allocation14 + $0x4] sm:$0xf]
        %v1322 = vld [vmem:[#allocation14 + $0x8] sm:$0xf]
        %v1323 = vld [vmem:[#allocation14 + $0xc] sm:$0xf]
        %v1324 = vld [vmem:[#allocation14 + $0x10] sm:$0xf]
        %v1325 = vld [vmem:[#allocation14 + $0x14] sm:$0xf]
        %v1326 = vld [vmem:[#allocation14 + $0x18] sm:$0xf]
        %v1327 = vld [vmem:[#allocation14 + $0x1c] sm:$0xf]
        %v1328 = vld [vmem:[#allocation14 + $0x20] sm:$0xf]
        %v1329 = vld [vmem:[#allocation14 + $0x24] sm:$0xf]
        %v1330 = vld [vmem:[#allocation14 + $0x28] sm:$0xf]
        %v1331 = vld [vmem:[#allocation14 + $0x2c] sm:$0xf]
        %v1332 = vld [vmem:[#allocation14 + $0x30] sm:$0xf]
        %v1333 = vld [vmem:[#allocation14 + $0x34] sm:$0xf]
        %v1334 = vld [vmem:[#allocation14 + $0x38] sm:$0xf]
        %v1335 = vld [vmem:[#allocation14 + $0x3c] sm:$0xf]
        %v1336 = vld [vmem:[%s12] sm:$0x1]
        %v1338 = vlaneseq
        %v1339 = vshrl.u32 %v1338, 7
        %v1340 = vsub.s32 0, %v1339
        %v1341 = vrot.slane %v1336, %v1340
        %v1359 = vunpack.c.l.b16 %v1320
        %v1360 = vunpack.c.l.b16 %v1321
        %v1361 = vunpack.c.l.b16 %v1322
        %v1362 = vunpack.c.l.b16 %v1323
        %v1363 = vunpack.c.l.b16 %v1324
        %v1364 = vunpack.c.l.b16 %v1325
        %v1365 = vunpack.c.l.b16 %v1326
        %v1366 = vunpack.c.l.b16 %v1327
        %v1367 = vunpack.c.l.b16 %v1328
        %v1368 = vunpack.c.l.b16 %v1329
        %v1369 = vunpack.c.l.b16 %v1330
        %v1370 = vunpack.c.l.b16 %v1331
        %v1371 = vunpack.c.l.b16 %v1332
        %v1372 = vunpack.c.l.b16 %v1333
        %v1373 = vunpack.c.l.b16 %v1334
        %v1374 = vunpack.c.l.b16 %v1335
        %v1375 = vpack.c.b16 %v1360, %v1359
        %v1376 = vpack.c.b16 %v1362, %v1361
        %v1377 = vpack.c.b16 %v1364, %v1363
        %v1378 = vpack.c.b16 %v1366, %v1365
        %v1379 = vpack.c.b16 %v1368, %v1367
        %v1380 = vpack.c.b16 %v1370, %v1369
        %v1381 = vpack.c.b16 %v1372, %v1371
        %v1382 = vpack.c.b16 %v1374, %v1373
        %1391 = vmatprep.subr.bf16.mxu0 0
        %1392 = vmatpush1.bf16.msra.mxu0 %v1375
        %1393 = vmatprep.subr.bf16.mxu0 0
        %1394 = vmatpush1.bf16.msra.mxu0 %v1376
        %1395 = vmatprep.subr.bf16.mxu0 0
        %1396 = vmatpush1.bf16.msra.mxu0 %v1377
        %1397 = vmatprep.subr.bf16.mxu0 0
        %1398 = vmatpush1.bf16.msra.mxu0 %v1378
        %1399 = vmatprep.subr.bf16.mxu0 0
        %1400 = vmatpush1.bf16.msra.mxu0 %v1379
        %1401 = vmatprep.subr.bf16.mxu0 0
        %1402 = vmatpush1.bf16.msra.mxu0 %v1380
        %1403 = vmatprep.subr.bf16.mxu0 0
        %1404 = vmatpush1.bf16.msra.mxu0 %v1381
        %1405 = vmatprep.subr.bf16.mxu0 0
        %1406 = vmatpush1.bf16.msra.mxu0 %v1382
        %1407 = vmatprep.subr.bf16.mxu0 0
        %1408 = vmatpush1.bf16.msra.mxu0 0
        %1409 = vmatprep.subr.bf16.mxu0 0
        %1410 = vmatpush1.bf16.msra.mxu0 0
        %1411 = vmatprep.subr.bf16.mxu0 0
        %1412 = vmatpush1.bf16.msra.mxu0 0
        %1413 = vmatprep.subr.bf16.mxu0 0
        %1414 = vmatpush1.bf16.msra.mxu0 0
        %1415 = vmatprep.subr.bf16.mxu0 0
        %1416 = vmatpush1.bf16.msra.mxu0 0
        %1417 = vmatprep.subr.bf16.mxu0 0
        %1418 = vmatpush1.bf16.msra.mxu0 0
        %1419 = vmatprep.subr.bf16.mxu0 0
        %1420 = vmatpush1.bf16.msra.mxu0 0
        %1421 = vmatprep.subr.bf16.mxu0 0
        %1422 = vmatpush1.bf16.msra.mxu0 0
        %1423 = vmatprep.mubr.bf16.mxu0 0
        %1424 = vmatmul.mubr.bf16.gmra.mrb[0].mxu0 %v1319
        %v1425 = vpop.f32.mrb[0].mxu0
        %v1426 = vadd.f32 %v1341, %v1425
        %v1427 = vpop.f32.mrb[0].mxu0
        %v1428 = vpop.f32.mrb[0].mxu0
        %v1429 = vadd.f32 %v1341, %v1428
        %v1430 = vpop.f32.mrb[0].mxu0
        %1431 = vdwg.mxu0
        %v1432 = vld [vmem:[%s654] sm:$0xf]
        %v1433 = vld [vmem:[%s654 + $0x4] sm:$0xf]
        %v1434 = vld [vmem:[#allocation16] sm:$0xff]
        %v1435 = vld [vmem:[#allocation16 + $0x8] sm:$0xff]
        %v1436 = vld [vmem:[#allocation16 + $0x10] sm:$0xff]
        %v1437 = vld [vmem:[#allocation16 + $0x18] sm:$0xff]
        %v1438 = vld [vmem:[#allocation16 + $0x20] sm:$0xff]
        %v1439 = vld [vmem:[#allocation16 + $0x28] sm:$0xff]
        %v1440 = vld [vmem:[#allocation16 + $0x30] sm:$0xff]
        %v1441 = vld [vmem:[#allocation16 + $0x38] sm:$0xff]
        %v1442 = vld [vmem:[#allocation16 + $0x40] sm:$0xff]
        %v1443 = vld [vmem:[#allocation16 + $0x48] sm:$0xff]
        %v1444 = vld [vmem:[#allocation16 + $0x50] sm:$0xff]
        %v1445 = vld [vmem:[#allocation16 + $0x58] sm:$0xff]
        %v1446 = vld [vmem:[#allocation16 + $0x60] sm:$0xff]
        %v1447 = vld [vmem:[#allocation16 + $0x68] sm:$0xff]
        %v1448 = vld [vmem:[#allocation16 + $0x70] sm:$0xff]
        %v1449 = vld [vmem:[#allocation16 + $0x78] sm:$0xff]
        %v1450 = vld [vmem:[%s663] sm:$0xf]
        %v1451 = vld [vmem:[%s663 + $0x4] sm:$0xf]
        %v1452 = vld [vmem:[#allocation16 + $0x80] sm:$0xff]
        %v1453 = vld [vmem:[#allocation16 + $0x88] sm:$0xff]
        %v1454 = vld [vmem:[#allocation16 + $0x90] sm:$0xff]
        %v1455 = vld [vmem:[#allocation16 + $0x98] sm:$0xff]
        %v1456 = vld [vmem:[#allocation16 + $0xa0] sm:$0xff]
        %v1457 = vld [vmem:[#allocation16 + $0xa8] sm:$0xff]
        %v1458 = vld [vmem:[#allocation16 + $0xb0] sm:$0xff]
        %v1459 = vld [vmem:[#allocation16 + $0xb8] sm:$0xff]
        %v1460 = vld [vmem:[#allocation16 + $0xc0] sm:$0xff]
        %v1461 = vld [vmem:[#allocation16 + $0xc8] sm:$0xff]
        %v1462 = vld [vmem:[#allocation16 + $0xd0] sm:$0xff]
        %v1463 = vld [vmem:[#allocation16 + $0xd8] sm:$0xff]
        %v1464 = vld [vmem:[#allocation16 + $0xe0] sm:$0xff]
        %v1465 = vld [vmem:[#allocation16 + $0xe8] sm:$0xff]
        %v1466 = vld [vmem:[#allocation16 + $0xf0] sm:$0xff]
        %v1467 = vld [vmem:[#allocation16 + $0xf8] sm:$0xff]
        %v1470 = vunpack.c.l.b16 %v1450
        %v1471 = vunpack.c.l.b16 %v1451
        %v1472 = vpack.c.b16 %v1471, %v1470
        %v1490 = vunpack.c.l.b16 %v1452
        %v1491 = vunpack.c.h.b16 %v1452
        %v1492 = vunpack.c.l.b16 %v1453
        %v1493 = vunpack.c.h.b16 %v1453
        %v1494 = vunpack.c.l.b16 %v1454
        %v1495 = vunpack.c.h.b16 %v1454
        %v1496 = vunpack.c.l.b16 %v1455
        %v1497 = vunpack.c.h.b16 %v1455
        %v1498 = vunpack.c.l.b16 %v1456
        %v1499 = vunpack.c.h.b16 %v1456
        %v1500 = vunpack.c.l.b16 %v1457
        %v1501 = vunpack.c.h.b16 %v1457
        %v1502 = vunpack.c.l.b16 %v1458
        %v1503 = vunpack.c.h.b16 %v1458
        %v1504 = vunpack.c.l.b16 %v1459
        %v1505 = vunpack.c.h.b16 %v1459
        %v1506 = vunpack.c.l.b16 %v1460
        %v1507 = vunpack.c.h.b16 %v1460
        %v1508 = vunpack.c.l.b16 %v1461
        %v1509 = vunpack.c.h.b16 %v1461
        %v1510 = vunpack.c.l.b16 %v1462
        %v1511 = vunpack.c.h.b16 %v1462
        %v1512 = vunpack.c.l.b16 %v1463
        %v1513 = vunpack.c.h.b16 %v1463
        %v1514 = vunpack.c.l.b16 %v1464
        %v1515 = vunpack.c.h.b16 %v1464
        %v1516 = vunpack.c.l.b16 %v1465
        %v1517 = vunpack.c.h.b16 %v1465
        %v1518 = vunpack.c.l.b16 %v1466
        %v1519 = vunpack.c.h.b16 %v1466
        %v1520 = vunpack.c.l.b16 %v1467
        %v1521 = vunpack.c.h.b16 %v1467
        %v1522 = vpack.c.b16 %v1492, %v1490
        %v1523 = vpack.c.b16 %v1493, %v1491
        %v1524 = vpack.c.b16 %v1496, %v1494
        %v1525 = vpack.c.b16 %v1497, %v1495
        %v1526 = vpack.c.b16 %v1500, %v1498
        %v1527 = vpack.c.b16 %v1501, %v1499
        %v1528 = vpack.c.b16 %v1504, %v1502
        %v1529 = vpack.c.b16 %v1505, %v1503
        %v1530 = vpack.c.b16 %v1508, %v1506
        %v1531 = vpack.c.b16 %v1509, %v1507
        %v1532 = vpack.c.b16 %v1512, %v1510
        %v1533 = vpack.c.b16 %v1513, %v1511
        %v1534 = vpack.c.b16 %v1516, %v1514
        %v1535 = vpack.c.b16 %v1517, %v1515
        %v1536 = vpack.c.b16 %v1520, %v1518
        %v1537 = vpack.c.b16 %v1521, %v1519
        %1554 = vmatprep.subr.bf16.mxu0 %v1523
        %1555 = vmatpush1.bf16.msra.mxu0 %v1522
        %1556 = vmatprep.subr.bf16.mxu0 %v1525
        %1557 = vmatpush1.bf16.msra.mxu0 %v1524
        %1558 = vmatprep.subr.bf16.mxu0 %v1527
        %1559 = vmatpush1.bf16.msra.mxu0 %v1526
        %1560 = vmatprep.subr.bf16.mxu0 %v1529
        %1561 = vmatpush1.bf16.msra.mxu0 %v1528
        %1562 = vmatprep.subr.bf16.mxu0 %v1531
        %1563 = vmatpush1.bf16.msra.mxu0 %v1530
        %1564 = vmatprep.subr.bf16.mxu0 %v1533
        %1565 = vmatpush1.bf16.msra.mxu0 %v1532
        %1566 = vmatprep.subr.bf16.mxu0 %v1535
        %1567 = vmatpush1.bf16.msra.mxu0 %v1534
        %1568 = vmatprep.subr.bf16.mxu0 %v1537
        %1569 = vmatpush1.bf16.msra.mxu0 %v1536
        %1570 = vmatprep.subr.bf16.mxu0 0
        %1571 = vmatpush1.bf16.msra.mxu0 0
        %1572 = vmatprep.subr.bf16.mxu0 0
        %1573 = vmatpush1.bf16.msra.mxu0 0
        %1574 = vmatprep.subr.bf16.mxu0 0
        %1575 = vmatpush1.bf16.msra.mxu0 0
        %1576 = vmatprep.subr.bf16.mxu0 0
        %1577 = vmatpush1.bf16.msra.mxu0 0
        %1578 = vmatprep.subr.bf16.mxu0 0
        %1579 = vmatpush1.bf16.msra.mxu0 0
        %1580 = vmatprep.subr.bf16.mxu0 0
        %1581 = vmatpush1.bf16.msra.mxu0 0
        %1582 = vmatprep.subr.bf16.mxu0 0
        %1583 = vmatpush1.bf16.msra.mxu0 0
        %1584 = vmatprep.subr.bf16.mxu0 0
        %1585 = vmatpush1.bf16.msra.mxu0 0
        %1586 = vmatprep.mubr.bf16.mxu0 0
        %1587 = vmatmul.mubr.bf16.gmra.mrb[0].mxu0 %v1472
        %v1588 = vpop.f32.mrb[0].mxu0
        %v1589 = vadd.f32 0.0, %v1588
        %v1590 = vpop.f32.mrb[0].mxu0
        %v1591 = vadd.f32 0.0, %v1590
        %v1592 = vpop.f32.mrb[0].mxu0
        %v1593 = vadd.f32 0.0, %v1592
        %v1594 = vpop.f32.mrb[0].mxu0
        %v1595 = vadd.f32 0.0, %v1594
        %1596 = vdwg.mxu0
        %v1599 = vunpack.c.l.b16 %v1432
        %v1600 = vunpack.c.l.b16 %v1433
        %v1601 = vpack.c.b16 %v1600, %v1599
        %v1619 = vunpack.c.l.b16 %v1434
        %v1620 = vunpack.c.h.b16 %v1434
        %v1621 = vunpack.c.l.b16 %v1435
        %v1622 = vunpack.c.h.b16 %v1435
        %v1623 = vunpack.c.l.b16 %v1436
        %v1624 = vunpack.c.h.b16 %v1436
        %v1625 = vunpack.c.l.b16 %v1437
        %v1626 = vunpack.c.h.b16 %v1437
        %v1627 = vunpack.c.l.b16 %v1438
        %v1628 = vunpack.c.h.b16 %v1438
        %v1629 = vunpack.c.l.b16 %v1439
        %v1630 = vunpack.c.h.b16 %v1439
        %v1631 = vunpack.c.l.b16 %v1440
        %v1632 = vunpack.c.h.b16 %v1440
        %v1633 = vunpack.c.l.b16 %v1441
        %v1634 = vunpack.c.h.b16 %v1441
        %v1635 = vunpack.c.l.b16 %v1442
        %v1636 = vunpack.c.h.b16 %v1442
        %v1637 = vunpack.c.l.b16 %v1443
        %v1638 = vunpack.c.h.b16 %v1443
        %v1639 = vunpack.c.l.b16 %v1444
        %v1640 = vunpack.c.h.b16 %v1444
        %v1641 = vunpack.c.l.b16 %v1445
        %v1642 = vunpack.c.h.b16 %v1445
        %v1643 = vunpack.c.l.b16 %v1446
        %v1644 = vunpack.c.h.b16 %v1446
        %v1645 = vunpack.c.l.b16 %v1447
        %v1646 = vunpack.c.h.b16 %v1447
        %v1647 = vunpack.c.l.b16 %v1448
        %v1648 = vunpack.c.h.b16 %v1448
        %v1649 = vunpack.c.l.b16 %v1449
        %v1650 = vunpack.c.h.b16 %v1449
        %v1651 = vpack.c.b16 %v1621, %v1619
        %v1652 = vpack.c.b16 %v1622, %v1620
        %v1653 = vpack.c.b16 %v1625, %v1623
        %v1654 = vpack.c.b16 %v1626, %v1624
        %v1655 = vpack.c.b16 %v1629, %v1627
        %v1656 = vpack.c.b16 %v1630, %v1628
        %v1657 = vpack.c.b16 %v1633, %v1631
        %v1658 = vpack.c.b16 %v1634, %v1632
        %v1659 = vpack.c.b16 %v1637, %v1635
        %v1660 = vpack.c.b16 %v1638, %v1636
        %v1661 = vpack.c.b16 %v1641, %v1639
        %v1662 = vpack.c.b16 %v1642, %v1640
        %v1663 = vpack.c.b16 %v1645, %v1643
        %v1664 = vpack.c.b16 %v1646, %v1644
        %v1665 = vpack.c.b16 %v1649, %v1647
        %v1666 = vpack.c.b16 %v1650, %v1648
        %1683 = vmatprep.subr.bf16.mxu0 %v1652
        %1684 = vmatpush1.bf16.msra.mxu0 %v1651
        %1685 = vmatprep.subr.bf16.mxu0 %v1654
        %1686 = vmatpush1.bf16.msra.mxu0 %v1653
        %1687 = vmatprep.subr.bf16.mxu0 %v1656
        %1688 = vmatpush1.bf16.msra.mxu0 %v1655
        %1689 = vmatprep.subr.bf16.mxu0 %v1658
        %1690 = vmatpush1.bf16.msra.mxu0 %v1657
        %1691 = vmatprep.subr.bf16.mxu0 %v1660
        %1692 = vmatpush1.bf16.msra.mxu0 %v1659
        %1693 = vmatprep.subr.bf16.mxu0 %v1662
        %1694 = vmatpush1.bf16.msra.mxu0 %v1661
        %1695 = vmatprep.subr.bf16.mxu0 %v1664
        %1696 = vmatpush1.bf16.msra.mxu0 %v1663
        %1697 = vmatprep.subr.bf16.mxu0 %v1666
        %1698 = vmatpush1.bf16.msra.mxu0 %v1665
        %1699 = vmatprep.subr.bf16.mxu0 0
        %1700 = vmatpush1.bf16.msra.mxu0 0
        %1701 = vmatprep.subr.bf16.mxu0 0
        %1702 = vmatpush1.bf16.msra.mxu0 0
        %1703 = vmatprep.subr.bf16.mxu0 0
        %1704 = vmatpush1.bf16.msra.mxu0 0
        %1705 = vmatprep.subr.bf16.mxu0 0
        %1706 = vmatpush1.bf16.msra.mxu0 0
        %1707 = vmatprep.subr.bf16.mxu0 0
        %1708 = vmatpush1.bf16.msra.mxu0 0
        %1709 = vmatprep.subr.bf16.mxu0 0
        %1710 = vmatpush1.bf16.msra.mxu0 0
        %1711 = vmatprep.subr.bf16.mxu0 0
        %1712 = vmatpush1.bf16.msra.mxu0 0
        %1713 = vmatprep.subr.bf16.mxu0 0
        %1714 = vmatpush1.bf16.msra.mxu0 0
        %1715 = vmatprep.mubr.bf16.mxu0 0
        %1716 = vmatmul.mubr.bf16.gmra.mrb[0].mxu0 %v1601
        %v1717 = vpop.f32.mrb[0].mxu0
        %v1718 = vadd.f32 %v1589, %v1717
        %v1719 = vpop.f32.mrb[0].mxu0
        %v1720 = vadd.f32 %v1591, %v1719
        %v1721 = vpop.f32.mrb[0].mxu0
        %v1722 = vadd.f32 %v1593, %v1721
        %v1723 = vpop.f32.mrb[0].mxu0
        %v1724 = vadd.f32 %v1595, %v1723
        %1725 = vdwg.mxu0
        %v1726 = vpack.c.bf16 %v1194, %v1191
        %v1727 = vld [vmem:[#allocation16 + $0x100] sm:$0xff]
        %v1728 = vld [vmem:[#allocation16 + $0x108] sm:$0xff]
        %v1729 = vld [vmem:[#allocation16 + $0x110] sm:$0xff]
        %v1730 = vld [vmem:[#allocation16 + $0x118] sm:$0xff]
        %v1731 = vld [vmem:[#allocation16 + $0x120] sm:$0xff]
        %v1732 = vld [vmem:[#allocation16 + $0x128] sm:$0xff]
        %v1733 = vld [vmem:[#allocation16 + $0x130] sm:$0xff]
        %v1734 = vld [vmem:[#allocation16 + $0x138] sm:$0xff]
        %v1735 = vld [vmem:[#allocation16 + $0x140] sm:$0xff]
        %v1736 = vld [vmem:[#allocation16 + $0x148] sm:$0xff]
        %v1737 = vld [vmem:[#allocation16 + $0x150] sm:$0xff]
        %v1738 = vld [vmem:[#allocation16 + $0x158] sm:$0xff]
        %v1739 = vld [vmem:[#allocation16 + $0x160] sm:$0xff]
        %v1740 = vld [vmem:[#allocation16 + $0x168] sm:$0xff]
        %v1741 = vld [vmem:[#allocation16 + $0x170] sm:$0xff]
        %v1742 = vld [vmem:[#allocation16 + $0x178] sm:$0xff]
        %v1759 = vunpack.c.l.b16 %v1727
        %v1760 = vunpack.c.h.b16 %v1727
        %v1761 = vunpack.c.l.b16 %v1728
        %v1762 = vunpack.c.h.b16 %v1728
        %v1763 = vunpack.c.l.b16 %v1729
        %v1764 = vunpack.c.h.b16 %v1729
        %v1765 = vunpack.c.l.b16 %v1730
        %v1766 = vunpack.c.h.b16 %v1730
        %v1767 = vunpack.c.l.b16 %v1731
        %v1768 = vunpack.c.h.b16 %v1731
        %v1769 = vunpack.c.l.b16 %v1732
        %v1770 = vunpack.c.h.b16 %v1732
        %v1771 = vunpack.c.l.b16 %v1733
        %v1772 = vunpack.c.h.b16 %v1733
        %v1773 = vunpack.c.l.b16 %v1734
        %v1774 = vunpack.c.h.b16 %v1734
        %v1775 = vunpack.c.l.b16 %v1735
        %v1776 = vunpack.c.h.b16 %v1735
        %v1777 = vunpack.c.l.b16 %v1736
        %v1778 = vunpack.c.h.b16 %v1736
        %v1779 = vunpack.c.l.b16 %v1737
        %v1780 = vunpack.c.h.b16 %v1737
        %v1781 = vunpack.c.l.b16 %v1738
        %v1782 = vunpack.c.h.b16 %v1738
        %v1783 = vunpack.c.l.b16 %v1739
        %v1784 = vunpack.c.h.b16 %v1739
        %v1785 = vunpack.c.l.b16 %v1740
        %v1786 = vunpack.c.h.b16 %v1740
        %v1787 = vunpack.c.l.b16 %v1741
        %v1788 = vunpack.c.h.b16 %v1741
        %v1789 = vunpack.c.l.b16 %v1742
        %v1790 = vunpack.c.h.b16 %v1742
        %v1791 = vpack.c.b16 %v1761, %v1759
        %v1792 = vpack.c.b16 %v1762, %v1760
        %v1793 = vpack.c.b16 %v1765, %v1763
        %v1794 = vpack.c.b16 %v1766, %v1764
        %v1795 = vpack.c.b16 %v1769, %v1767
        %v1796 = vpack.c.b16 %v1770, %v1768
        %v1797 = vpack.c.b16 %v1773, %v1771
        %v1798 = vpack.c.b16 %v1774, %v1772
        %v1799 = vpack.c.b16 %v1777, %v1775
        %v1800 = vpack.c.b16 %v1778, %v1776
        %v1801 = vpack.c.b16 %v1781, %v1779
        %v1802 = vpack.c.b16 %v1782, %v1780
        %v1803 = vpack.c.b16 %v1785, %v1783
        %v1804 = vpack.c.b16 %v1786, %v1784
        %v1805 = vpack.c.b16 %v1789, %v1787
        %v1806 = vpack.c.b16 %v1790, %v1788
        %1823 = vmatprep.subr.bf16.mxu0 %v1792
        %1824 = vmatpush1.bf16.msra.mxu0 %v1791
        %1825 = vmatprep.subr.bf16.mxu0 %v1794
        %1826 = vmatpush1.bf16.msra.mxu0 %v1793
        %1827 = vmatprep.subr.bf16.mxu0 %v1796
        %1828 = vmatpush1.bf16.msra.mxu0 %v1795
        %1829 = vmatprep.subr.bf16.mxu0 %v1798
        %1830 = vmatpush1.bf16.msra.mxu0 %v1797
        %1831 = vmatprep.subr.bf16.mxu0 %v1800
        %1832 = vmatpush1.bf16.msra.mxu0 %v1799
        %1833 = vmatprep.subr.bf16.mxu0 %v1802
        %1834 = vmatpush1.bf16.msra.mxu0 %v1801
        %1835 = vmatprep.subr.bf16.mxu0 %v1804
        %1836 = vmatpush1.bf16.msra.mxu0 %v1803
        %1837 = vmatprep.subr.bf16.mxu0 %v1806
        %1838 = vmatpush1.bf16.msra.mxu0 %v1805
        %1839 = vmatprep.subr.bf16.mxu0 0
        %1840 = vmatpush1.bf16.msra.mxu0 0
        %1841 = vmatprep.subr.bf16.mxu0 0
        %1842 = vmatpush1.bf16.msra.mxu0 0
        %1843 = vmatprep.subr.bf16.mxu0 0
        %1844 = vmatpush1.bf16.msra.mxu0 0
        %1845 = vmatprep.subr.bf16.mxu0 0
        %1846 = vmatpush1.bf16.msra.mxu0 0
        %1847 = vmatprep.subr.bf16.mxu0 0
        %1848 = vmatpush1.bf16.msra.mxu0 0
        %1849 = vmatprep.subr.bf16.mxu0 0
        %1850 = vmatpush1.bf16.msra.mxu0 0
        %1851 = vmatprep.subr.bf16.mxu0 0
        %1852 = vmatpush1.bf16.msra.mxu0 0
        %1853 = vmatprep.subr.bf16.mxu0 0
        %1854 = vmatpush1.bf16.msra.mxu0 0
        %1855 = vmatprep.mubr.bf16.mxu0 0
        %1856 = vmatmul.mubr.bf16.gmra.mrb[0].mxu0 %v1726
        %v1857 = vpop.f32.mrb[0].mxu0
        %v1858 = vadd.f32 0.0, %v1857
        %v1859 = vpop.f32.mrb[0].mxu0
        %v1860 = vadd.f32 0.0, %v1859
        %v1861 = vpop.f32.mrb[0].mxu0
        %v1862 = vadd.f32 0.0, %v1861
        %v1863 = vpop.f32.mrb[0].mxu0
        %v1864 = vadd.f32 0.0, %v1863
        %1865 = vdwg.mxu0
        %v1866 = vadd.f32 %v1718, %v1858
        %v1867 = vadd.f32 %v1720, %v1860
        %v1868 = vadd.f32 %v1722, %v1862
        %v1869 = vadd.f32 %v1724, %v1864
        %v1870 = vpack.c.bf16 %v1429, %v1426
        %v1871 = vld [vmem:[#allocation16 + $0x180] sm:$0xff]
        %v1872 = vld [vmem:[#allocation16 + $0x188] sm:$0xff]
        %v1873 = vld [vmem:[#allocation16 + $0x190] sm:$0xff]
        %v1874 = vld [vmem:[#allocation16 + $0x198] sm:$0xff]
        %v1875 = vld [vmem:[#allocation16 + $0x1a0] sm:$0xff]
        %v1876 = vld [vmem:[#allocation16 + $0x1a8] sm:$0xff]
        %v1877 = vld [vmem:[#allocation16 + $0x1b0] sm:$0xff]
        %v1878 = vld [vmem:[#allocation16 + $0x1b8] sm:$0xff]
        %v1879 = vld [vmem:[#allocation16 + $0x1c0] sm:$0xff]
        %v1880 = vld [vmem:[#allocation16 + $0x1c8] sm:$0xff]
        %v1881 = vld [vmem:[#allocation16 + $0x1d0] sm:$0xff]
        %v1882 = vld [vmem:[#allocation16 + $0x1d8] sm:$0xff]
        %v1883 = vld [vmem:[#allocation16 + $0x1e0] sm:$0xff]
        %v1884 = vld [vmem:[#allocation16 + $0x1e8] sm:$0xff]
        %v1885 = vld [vmem:[#allocation16 + $0x1f0] sm:$0xff]
        %v1886 = vld [vmem:[#allocation16 + $0x1f8] sm:$0xff]
        %v1903 = vunpack.c.l.b16 %v1871
        %v1904 = vunpack.c.h.b16 %v1871
        %v1905 = vunpack.c.l.b16 %v1872
        %v1906 = vunpack.c.h.b16 %v1872
        %v1907 = vunpack.c.l.b16 %v1873
        %v1908 = vunpack.c.h.b16 %v1873
        %v1909 = vunpack.c.l.b16 %v1874
        %v1910 = vunpack.c.h.b16 %v1874
        %v1911 = vunpack.c.l.b16 %v1875
        %v1912 = vunpack.c.h.b16 %v1875
        %v1913 = vunpack.c.l.b16 %v1876
        %v1914 = vunpack.c.h.b16 %v1876
        %v1915 = vunpack.c.l.b16 %v1877
        %v1916 = vunpack.c.h.b16 %v1877
        %v1917 = vunpack.c.l.b16 %v1878
        %v1918 = vunpack.c.h.b16 %v1878
        %v1919 = vunpack.c.l.b16 %v1879
        %v1920 = vunpack.c.h.b16 %v1879
        %v1921 = vunpack.c.l.b16 %v1880
        %v1922 = vunpack.c.h.b16 %v1880
        %v1923 = vunpack.c.l.b16 %v1881
        %v1924 = vunpack.c.h.b16 %v1881
        %v1925 = vunpack.c.l.b16 %v1882
        %v1926 = vunpack.c.h.b16 %v1882
        %v1927 = vunpack.c.l.b16 %v1883
        %v1928 = vunpack.c.h.b16 %v1883
        %v1929 = vunpack.c.l.b16 %v1884
        %v1930 = vunpack.c.h.b16 %v1884
        %v1931 = vunpack.c.l.b16 %v1885
        %v1932 = vunpack.c.h.b16 %v1885
        %v1933 = vunpack.c.l.b16 %v1886
        %v1934 = vunpack.c.h.b16 %v1886
        %v1935 = vpack.c.b16 %v1905, %v1903
        %v1936 = vpack.c.b16 %v1906, %v1904
        %v1937 = vpack.c.b16 %v1909, %v1907
        %v1938 = vpack.c.b16 %v1910, %v1908
        %v1939 = vpack.c.b16 %v1913, %v1911
        %v1940 = vpack.c.b16 %v1914, %v1912
        %v1941 = vpack.c.b16 %v1917, %v1915
        %v1942 = vpack.c.b16 %v1918, %v1916
        %v1943 = vpack.c.b16 %v1921, %v1919
        %v1944 = vpack.c.b16 %v1922, %v1920
        %v1945 = vpack.c.b16 %v1925, %v1923
        %v1946 = vpack.c.b16 %v1926, %v1924
        %v1947 = vpack.c.b16 %v1929, %v1927
        %v1948 = vpack.c.b16 %v1930, %v1928
        %v1949 = vpack.c.b16 %v1933, %v1931
        %v1950 = vpack.c.b16 %v1934, %v1932
        %1967 = vmatprep.subr.bf16.mxu0 %v1936
        %1968 = vmatpush1.bf16.msra.mxu0 %v1935
        %1969 = vmatprep.subr.bf16.mxu0 %v1938
        %1970 = vmatpush1.bf16.msra.mxu0 %v1937
        %1971 = vmatprep.subr.bf16.mxu0 %v1940
        %1972 = vmatpush1.bf16.msra.mxu0 %v1939
        %1973 = vmatprep.subr.bf16.mxu0 %v1942
        %1974 = vmatpush1.bf16.msra.mxu0 %v1941
        %1975 = vmatprep.subr.bf16.mxu0 %v1944
        %1976 = vmatpush1.bf16.msra.mxu0 %v1943
        %1977 = vmatprep.subr.bf16.mxu0 %v1946
        %1978 = vmatpush1.bf16.msra.mxu0 %v1945
        %1979 = vmatprep.subr.bf16.mxu0 %v1948
        %1980 = vmatpush1.bf16.msra.mxu0 %v1947
        %1981 = vmatprep.subr.bf16.mxu0 %v1950
        %1982 = vmatpush1.bf16.msra.mxu0 %v1949
        %1983 = vmatprep.subr.bf16.mxu0 0
        %1984 = vmatpush1.bf16.msra.mxu0 0
        %1985 = vmatprep.subr.bf16.mxu0 0
        %1986 = vmatpush1.bf16.msra.mxu0 0
        %1987 = vmatprep.subr.bf16.mxu0 0
        %1988 = vmatpush1.bf16.msra.mxu0 0
        %1989 = vmatprep.subr.bf16.mxu0 0
        %1990 = vmatpush1.bf16.msra.mxu0 0
        %1991 = vmatprep.subr.bf16.mxu0 0
        %1992 = vmatpush1.bf16.msra.mxu0 0
        %1993 = vmatprep.subr.bf16.mxu0 0
        %1994 = vmatpush1.bf16.msra.mxu0 0
        %1995 = vmatprep.subr.bf16.mxu0 0
        %1996 = vmatpush1.bf16.msra.mxu0 0
        %1997 = vmatprep.subr.bf16.mxu0 0
        %1998 = vmatpush1.bf16.msra.mxu0 0
        %1999 = vmatprep.mubr.bf16.mxu0 0
        %2000 = vmatmul.mubr.bf16.gmra.mrb[0].mxu0 %v1870
        %v2001 = vpop.f32.mrb[0].mxu0
        %v2002 = vadd.f32 0.0, %v2001
        %v2003 = vpop.f32.mrb[0].mxu0
        %v2004 = vadd.f32 0.0, %v2003
        %v2005 = vpop.f32.mrb[0].mxu0
        %v2006 = vadd.f32 0.0, %v2005
        %v2007 = vpop.f32.mrb[0].mxu0
        %v2008 = vadd.f32 0.0, %v2007
        %2009 = vdwg.mxu0
        %v2010 = vadd.f32 %v1866, %v2002
        %v2011 = vadd.f32 %v1867, %v2004
        %v2012 = vadd.f32 %v1868, %v2006
        %v2013 = vadd.f32 %v1869, %v2008
        %v2014 = vld [vmem:[%s14] sm:$0x3]
        %v2016 = vlaneseq
        %v2017 = vshrl.u32 %v2016, 7
        %v2018 = vsub.s32 0, %v2017
        %v2019 = vrot.slane %v2014, %v2018
        %v2020 = vlaneseq
        %v2021 = vshrl.u32 %v2020, 7
        %v2022 = vsub.s32 1, %v2021
        %v2023 = vrot.slane %v2014, %v2022
        %v2026 = vadd.f32 %v2010, %v2019
        %v2027 = vadd.f32 %v2011, %v2023
        %v2028 = vadd.f32 %v2012, %v2019
        %v2029 = vadd.f32 %v2013, %v2023
        %v2030 = vmax.f32 %v2026, 0.0
        %v2031 = vmax.f32 %v2027, 0.0
        %v2032 = vmax.f32 %v2028, 0.0
        %v2033 = vmax.f32 %v2029, 0.0
        %v2034 = vpack.c.bf16 %v2032, %v2030
        %v2035 = vpack.c.bf16 %v2033, %v2031
        %v2036 = vld [vmem:[#allocation17] sm:$0xff]
        %v2037 = vld [vmem:[#allocation17 + $0x8] sm:$0xff]
        %v2038 = vld [vmem:[#allocation17 + $0x10] sm:$0xff]
        %v2039 = vld [vmem:[#allocation17 + $0x18] sm:$0xff]
        %v2040 = vld [vmem:[#allocation17 + $0x20] sm:$0xff]
        %v2041 = vld [vmem:[#allocation17 + $0x28] sm:$0xff]
        %v2042 = vld [vmem:[#allocation17 + $0x30] sm:$0xff]
        %v2043 = vld [vmem:[#allocation17 + $0x38] sm:$0xff]
        %v2044 = vld [vmem:[#allocation17 + $0x40] sm:$0xff]
        %v2045 = vld [vmem:[#allocation17 + $0x48] sm:$0xff]
        %v2046 = vld [vmem:[#allocation17 + $0x50] sm:$0xff]
        %v2047 = vld [vmem:[#allocation17 + $0x58] sm:$0xff]
        %v2048 = vld [vmem:[#allocation17 + $0x60] sm:$0xff]
        %v2049 = vld [vmem:[#allocation17 + $0x68] sm:$0xff]
        %v2050 = vld [vmem:[#allocation17 + $0x70] sm:$0xff]
        %v2051 = vld [vmem:[#allocation17 + $0x78] sm:$0xff]
        %v2052 = vld [vmem:[#allocation17 + $0x80] sm:$0xff]
        %v2053 = vld [vmem:[#allocation17 + $0x88] sm:$0xff]
        %v2054 = vld [vmem:[#allocation17 + $0x90] sm:$0xff]
        %v2055 = vld [vmem:[#allocation17 + $0x98] sm:$0xff]
        %v2056 = vld [vmem:[#allocation17 + $0xa0] sm:$0xff]
        %v2057 = vld [vmem:[#allocation17 + $0xa8] sm:$0xff]
        %v2058 = vld [vmem:[#allocation17 + $0xb0] sm:$0xff]
        %v2059 = vld [vmem:[#allocation17 + $0xb8] sm:$0xff]
        %v2060 = vld [vmem:[#allocation17 + $0xc0] sm:$0xff]
        %v2061 = vld [vmem:[#allocation17 + $0xc8] sm:$0xff]
        %v2062 = vld [vmem:[#allocation17 + $0xd0] sm:$0xff]
        %v2063 = vld [vmem:[#allocation17 + $0xd8] sm:$0xff]
        %v2064 = vld [vmem:[#allocation17 + $0xe0] sm:$0xff]
        %v2065 = vld [vmem:[#allocation17 + $0xe8] sm:$0xff]
        %v2066 = vld [vmem:[#allocation17 + $0xf0] sm:$0xff]
        %v2067 = vld [vmem:[#allocation17 + $0xf8] sm:$0xff]
        %v2068 = vld [vmem:[%s16] sm:$0x3]
        %v2070 = vlaneseq
        %v2071 = vshrl.u32 %v2070, 7
        %v2072 = vsub.s32 0, %v2071
        %v2073 = vrot.slane %v2068, %v2072
        %v2074 = vlaneseq
        %v2075 = vshrl.u32 %v2074, 7
        %v2076 = vsub.s32 1, %v2075
        %v2077 = vrot.slane %v2068, %v2076
        %v2112 = vunpack.c.l.b16 %v2036
        %v2113 = vunpack.c.h.b16 %v2036
        %v2114 = vunpack.c.l.b16 %v2037
        %v2115 = vunpack.c.h.b16 %v2037
        %v2116 = vunpack.c.l.b16 %v2038
        %v2117 = vunpack.c.h.b16 %v2038
        %v2118 = vunpack.c.l.b16 %v2039
        %v2119 = vunpack.c.h.b16 %v2039
        %v2120 = vunpack.c.l.b16 %v2040
        %v2121 = vunpack.c.h.b16 %v2040
        %v2122 = vunpack.c.l.b16 %v2041
        %v2123 = vunpack.c.h.b16 %v2041
        %v2124 = vunpack.c.l.b16 %v2042
        %v2125 = vunpack.c.h.b16 %v2042
        %v2126 = vunpack.c.l.b16 %v2043
        %v2127 = vunpack.c.h.b16 %v2043
        %v2128 = vunpack.c.l.b16 %v2044
        %v2129 = vunpack.c.h.b16 %v2044
        %v2130 = vunpack.c.l.b16 %v2045
        %v2131 = vunpack.c.h.b16 %v2045
        %v2132 = vunpack.c.l.b16 %v2046
        %v2133 = vunpack.c.h.b16 %v2046
        %v2134 = vunpack.c.l.b16 %v2047
        %v2135 = vunpack.c.h.b16 %v2047
        %v2136 = vunpack.c.l.b16 %v2048
        %v2137 = vunpack.c.h.b16 %v2048
        %v2138 = vunpack.c.l.b16 %v2049
        %v2139 = vunpack.c.h.b16 %v2049
        %v2140 = vunpack.c.l.b16 %v2050
        %v2141 = vunpack.c.h.b16 %v2050
        %v2142 = vunpack.c.l.b16 %v2051
        %v2143 = vunpack.c.h.b16 %v2051
        %v2144 = vunpack.c.l.b16 %v2052
        %v2145 = vunpack.c.h.b16 %v2052
        %v2146 = vunpack.c.l.b16 %v2053
        %v2147 = vunpack.c.h.b16 %v2053
        %v2148 = vunpack.c.l.b16 %v2054
        %v2149 = vunpack.c.h.b16 %v2054
        %v2150 = vunpack.c.l.b16 %v2055
        %v2151 = vunpack.c.h.b16 %v2055
        %v2152 = vunpack.c.l.b16 %v2056
        %v2153 = vunpack.c.h.b16 %v2056
        %v2154 = vunpack.c.l.b16 %v2057
        %v2155 = vunpack.c.h.b16 %v2057
        %v2156 = vunpack.c.l.b16 %v2058
        %v2157 = vunpack.c.h.b16 %v2058
        %v2158 = vunpack.c.l.b16 %v2059
        %v2159 = vunpack.c.h.b16 %v2059
        %v2160 = vunpack.c.l.b16 %v2060
        %v2161 = vunpack.c.h.b16 %v2060
        %v2162 = vunpack.c.l.b16 %v2061
        %v2163 = vunpack.c.h.b16 %v2061
        %v2164 = vunpack.c.l.b16 %v2062
        %v2165 = vunpack.c.h.b16 %v2062
        %v2166 = vunpack.c.l.b16 %v2063
        %v2167 = vunpack.c.h.b16 %v2063
        %v2168 = vunpack.c.l.b16 %v2064
        %v2169 = vunpack.c.h.b16 %v2064
        %v2170 = vunpack.c.l.b16 %v2065
        %v2171 = vunpack.c.h.b16 %v2065
        %v2172 = vunpack.c.l.b16 %v2066
        %v2173 = vunpack.c.h.b16 %v2066
        %v2174 = vunpack.c.l.b16 %v2067
        %v2175 = vunpack.c.h.b16 %v2067
        %v2176 = vpack.c.b16 %v2114, %v2112
        %v2177 = vpack.c.b16 %v2115, %v2113
        %v2178 = vpack.c.b16 %v2118, %v2116
        %v2179 = vpack.c.b16 %v2119, %v2117
        %v2180 = vpack.c.b16 %v2122, %v2120
        %v2181 = vpack.c.b16 %v2123, %v2121
        %v2182 = vpack.c.b16 %v2126, %v2124
        %v2183 = vpack.c.b16 %v2127, %v2125
        %v2184 = vpack.c.b16 %v2130, %v2128
        %v2185 = vpack.c.b16 %v2131, %v2129
        %v2186 = vpack.c.b16 %v2134, %v2132
        %v2187 = vpack.c.b16 %v2135, %v2133
        %v2188 = vpack.c.b16 %v2138, %v2136
        %v2189 = vpack.c.b16 %v2139, %v2137
        %v2190 = vpack.c.b16 %v2142, %v2140
        %v2191 = vpack.c.b16 %v2143, %v2141
        %v2192 = vpack.c.b16 %v2146, %v2144
        %v2193 = vpack.c.b16 %v2147, %v2145
        %v2194 = vpack.c.b16 %v2150, %v2148
        %v2195 = vpack.c.b16 %v2151, %v2149
        %v2196 = vpack.c.b16 %v2154, %v2152
        %v2197 = vpack.c.b16 %v2155, %v2153
        %v2198 = vpack.c.b16 %v2158, %v2156
        %v2199 = vpack.c.b16 %v2159, %v2157
        %v2200 = vpack.c.b16 %v2162, %v2160
        %v2201 = vpack.c.b16 %v2163, %v2161
        %v2202 = vpack.c.b16 %v2166, %v2164
        %v2203 = vpack.c.b16 %v2167, %v2165
        %v2204 = vpack.c.b16 %v2170, %v2168
        %v2205 = vpack.c.b16 %v2171, %v2169
        %v2206 = vpack.c.b16 %v2174, %v2172
        %v2207 = vpack.c.b16 %v2175, %v2173
        %2240 = vmatprep.subr.bf16.mxu0 %v2177
        %2241 = vmatpush1.bf16.msra.mxu0 %v2176
        %2242 = vmatprep.subr.bf16.mxu0 %v2179
        %2243 = vmatpush1.bf16.msra.mxu0 %v2178
        %2244 = vmatprep.subr.bf16.mxu0 %v2181
        %2245 = vmatpush1.bf16.msra.mxu0 %v2180
        %2246 = vmatprep.subr.bf16.mxu0 %v2183
        %2247 = vmatpush1.bf16.msra.mxu0 %v2182
        %2248 = vmatprep.subr.bf16.mxu0 %v2185
        %2249 = vmatpush1.bf16.msra.mxu0 %v2184
        %2250 = vmatprep.subr.bf16.mxu0 %v2187
        %2251 = vmatpush1.bf16.msra.mxu0 %v2186
        %2252 = vmatprep.subr.bf16.mxu0 %v2189
        %2253 = vmatpush1.bf16.msra.mxu0 %v2188
        %2254 = vmatprep.subr.bf16.mxu0 %v2191
        %2255 = vmatpush1.bf16.msra.mxu0 %v2190
        %2256 = vmatprep.subr.bf16.mxu0 %v2193
        %2257 = vmatpush1.bf16.msra.mxu0 %v2192
        %2258 = vmatprep.subr.bf16.mxu0 %v2195
        %2259 = vmatpush1.bf16.msra.mxu0 %v2194
        %2260 = vmatprep.subr.bf16.mxu0 %v2197
        %2261 = vmatpush1.bf16.msra.mxu0 %v2196
        %2262 = vmatprep.subr.bf16.mxu0 %v2199
        %2263 = vmatpush1.bf16.msra.mxu0 %v2198
        %2264 = vmatprep.subr.bf16.mxu0 %v2201
        %2265 = vmatpush1.bf16.msra.mxu0 %v2200
        %2266 = vmatprep.subr.bf16.mxu0 %v2203
        %2267 = vmatpush1.bf16.msra.mxu0 %v2202
        %2268 = vmatprep.subr.bf16.mxu0 %v2205
        %2269 = vmatpush1.bf16.msra.mxu0 %v2204
        %2270 = vmatprep.subr.bf16.mxu0 %v2207
        %2271 = vmatpush1.bf16.msra.mxu0 %v2206
        %2272 = vmatprep.mubr.bf16.mxu0 %v2035
        %2273 = vmatmul.mubr.bf16.gmra.mrb[0].mxu0 %v2034
        %v2274 = vpop.f32.mrb[0].mxu0
        %v2275 = vadd.f32 %v2073, %v2274
        %v2276 = vpop.f32.mrb[0].mxu0
        %v2277 = vadd.f32 %v2077, %v2276
        %v2278 = vpop.f32.mrb[0].mxu0
        %v2279 = vadd.f32 %v2073, %v2278
        %v2280 = vpop.f32.mrb[0].mxu0
        %v2281 = vadd.f32 %v2077, %v2280
        %2282 = vdwg.mxu0
        %2283 = vst [vmem:[%s770] sm:$0xff] %v2275
        %2284 = vst [vmem:[%s770 + $0x8] sm:$0xff] %v2277
        %2285 = vst [vmem:[%s770 + $0x10] sm:$0xff] %v2279
        %2286 = vst [vmem:[%s770 + $0x18] sm:$0xff] %v2281
        %s2287 = sand.u32 %s428, 1
        %s2288 = scalar_lea.sflag [#allocation4], %s2287
        %s2289 = sand.u32 %s428, 1
        %s2290 = smul.addr %s2289, 32
        %s2291 = scalar_lea.vmem [#allocation19], %s2290
        // Predicated region
        $region129: #{tpu_custom_call.1} parent=87 // pred_check
          %p2292 = pneg %p438
        $region130: #{tpu_custom_call.1} parent=87 // pred_check_branch
          %2294 = sbr.rel (%p2292) target = $region132
        $region131: #{tpu_custom_call.1} parent=87 // pred_region
          %s2295 = smul.u32 2, %s43
          %s2297 = ssub.s32 512, 512
          %2298 = vsyncadd %s2288, %s2297
          %s2299 = smul.addr %s2295, 2
          %s2300 = smul.addr %s2299, 128
          %s2301 = scalar_lea.hbm %s17, %s2300
          %s2302 = sshll.u32 %s2291, 4
          %s2303 = int_to_ptr.vmem [resolvable:$true] %s2302
          %2308 = dma.vmem_to_hbm [thread:$0]  %s2303, 512, %s2301, %s2288, 256, 256, 16
        $region132: #{tpu_custom_call.1} parent=87 // pred_fallthru
          _
      $region88: #{tpu_custom_call.1} parent=5 // pred_fallthru
        _
      %p2309 = scmp.le.s32.totalorder 2, %s38
      // Predicated region
      $region133: #{tpu_custom_call.1} parent=5 // pred_check
        %p2310 = pneg %p2309
      $region134: #{tpu_custom_call.1} parent=5 // pred_check_branch
        %2312 = sbr.rel (%p2310) target = $region136
      $region135: #{tpu_custom_call.1} parent=5 // pred_region
        %s2313 = ssub.s32 %s38, 2
        // Predicated region
        $region137: #{tpu_custom_call.1} parent=135 // pred_check
          %p2314 = pneg %p444
        $region138: #{tpu_custom_call.1} parent=135 // pred_check_branch
          %2316 = sbr.rel (%p2314) target = $region140
        $region139: #{tpu_custom_call.1} parent=135 // pred_region
          %s2317 = sand.u32 %s429, 1
          %s2318 = scalar_lea.sflag [#allocation4], %s2317
          %s2319 = sand.u32 %s429, 1
          %s2320 = smul.addr %s2319, 32
          %s2321 = scalar_lea.vmem [#allocation19], %s2320
          %2322 = dma.done %s2318, 512
        $region140: #{tpu_custom_call.1} parent=135 // pred_fallthru
          _
      $region136: #{tpu_custom_call.1} parent=5 // pred_fallthru
        _
    $region6: #{tpu_custom_call.1} parent=1 // loop_footer
      %s42 = sadd.s32 1, %s38
    $region7: #{tpu_custom_call.1} parent=1 // loop_footer_branch
      %37 = sbr.rel target = $region3
    $region8: #{tpu_custom_call.1} parent=1 // loop_exit
      _
    %2323 = vsyncpa [#allocation3], 1
    %s2324 = scalar_lea.sflag [#allocation3], 1
    %2325 = vsyncpa %s2324, 1
    %2326 = vsyncpa [#allocation6], 1
    %s2327 = scalar_lea.sflag [#allocation6], 1
    %2328 = vsyncpa %s2327, 1
    %2329 = vsyncpa [#allocation9], 1
    %s2330 = scalar_lea.sflag [#allocation9], 1
    %2331 = vsyncpa %s2330, 1
    %2332 = vsyncpa [#allocation12], 1
    %2333 = vsyncpa [#allocation15], 1
    %2334 = vsyncpa [#allocation18], 1
    %2335 = vsyncpa [#allocation4], 1
    %s2336 = scalar_lea.sflag [#allocation4], 1
    %2337 = vsyncpa %s2336, 1

</llo_original>
